<compile_context>
chip_gen: v7x
topology: tpu7x:2x2x1
jax: 0.10.0
libtpu: 0.0.40
codegen_flags: <defaults>
</compile_context>

<pallas_src>
import functools

import jax
import jax.numpy as jnp
from jax.experimental import pallas as pl
from jax.experimental.pallas import tpu as pltpu

# ---------------------------------------------------------------------------
# Dimensions implied by the module's __init__ (small, synthetic).
LATENT_DIM = 16
N_CLASSES = 10
DATA_DIM = 32                       # opt.data_dim
IN_DIM = LATENT_DIM + N_CLASSES     # 26
H1, H2, H3 = 256, 128, 64
BN_EPS = 1e-5

# Lane-dense zero-padded widths (padding is mathematically exact).
IN_PAD = 128     # 26 -> 128
H3_PAD = 128     # 64 -> 128
OUT_PAD = 128    # 32 -> 128 ; sliced back to 32 in the wrapper

MAX_BATCH_TILE = 2048        # rows per grid step (feedback: 1024-2048)
FUSED_MAX_ROWS = 8192        # fused path keeps B*(256+128+128) bf16 in VMEM (~8 MiB cap)
VMEM_LIMIT_BYTES = 32 * 1024 * 1024


# ---------------------------------------------------------------------------
# Small helpers
# ---------------------------------------------------------------------------
def _round_up(x, m):
    return (x + m - 1) // m * m


def _choose_batch_tile(b):
    """Largest power-of-two batch tile (32..MAX_BATCH_TILE) whose zero-padding
    waste stays small.  32-row minimum keeps bf16/int8 sublane tiling clean."""
    tb = 32
    for cand in (64, 128, 256, 512, 1024, 2048):
        if cand > MAX_BATCH_TILE:
            break
        if (-b) % cand <= max(b // 8, 32):
            tb = cand
    return tb


def _dropout_masks(key, b):
    """Per-layer keep masks as int8 0/1 (quarter the traffic of uint32 words;
    layer 3 gets its own contiguous (B, H2) array)."""
    k1, k2 = jax.random.split(key)
    keep1 = jax.random.bernoulli(k1, 0.5, (b, H1)).astype(jnp.int8)
    keep2 = jax.random.bernoulli(k2, 0.5, (b, H2)).astype(jnp.int8)
    return keep1, keep2


# ---------------------------------------------------------------------------
# Fused path: one pallas_call, grid = (4 passes, batch tiles)
# ---------------------------------------------------------------------------
def _make_fused_kernel(tb, n_real):
    inv_n = 1.0 / float(n_real)   # real (unpadded) batch size

    def kernel(x_ref, m1_ref, m2_ref,
               w1_ref, w2_ref, w3_ref, w4_ref, b4_ref,
               g1_ref, be1_ref, g2_ref, be2_ref, g3_ref, be3_ref,
               out_ref,
               h1_s, h2_s, h3_s, sum_s, sq_s, sc_s, sh_s):
        p = pl.program_id(0)
        i = pl.program_id(1)
        last = pl.num_programs(1) - 1
        rows = pl.ds(pl.multiple_of(i * tb, tb), tb)

        def accum_stats(h, width):
            part_s = jnp.sum(h, axis=0, keepdims=True)
            part_q = jnp.sum(h * h, axis=0, keepdims=True)

            @pl.when(i == 0)
            def _():
                sum_s[:, :width] = part_s
                sq_s[:, :width] = part_q

            @pl.when(i != 0)
            def _():
                sum_s[:, :width] += part_s
                sq_s[:, :width] += part_q

        def fold(width, gamma, beta, post_scale):
            # Training-mode BN (batch mean, biased var) folded to scale/shift,
            # with the dropout survivor x2 folded in via post_scale.
            mu = sum_s[:, :width] * inv_n
            var = jnp.maximum(sq_s[:, :width] * inv_n - mu * mu, 0.0)
            ginv = gamma * jax.lax.rsqrt(var + BN_EPS)
            sc_s[:, :width] = post_scale * ginv
            sh_s[:, :width] = post_scale * (beta - mu * ginv)

        def bn_relu(h_bf16, width):
            h = h_bf16.astype(jnp.float32)
            return jnp.maximum(h * sc_s[:, :width] + sh_s[:, :width], 0.0)

        # ---- pass 0: Linear(26->256), stats for BN1 -------------------------
        @pl.when(p == 0)
        def _pass0():
            h = jnp.dot(x_ref[...], w1_ref[...],
                        preferred_element_type=jnp.float32)
            accum_stats(h, H1)
            h1_s[rows, :] = h.astype(h1_s.dtype)

            @pl.when(i == last)
            def _():
                fold(H1, g1_ref[...], be1_ref[...], 2.0)

        # ---- pass 1: BN1+ReLU+Drop1, Linear(256->128), stats for BN2 --------
        @pl.when(p == 1)
        def _pass1():
            a = bn_relu(h1_s[rows, :], H1) * m1_ref[...].astype(jnp.float32)
            h = jnp.dot(a.astype(jnp.bfloat16), w2_ref[...],
                        preferred_element_type=jnp.float32)
            accum_stats(h, H2)
            h2_s[rows, :] = h.astype(h2_s.dtype)

            @pl.when(i == last)
            def _():
                fold(H2, g2_ref[...], be2_ref[...], 2.0)

        # ---- pass 2: BN2+ReLU+Drop2, Linear(128->64pad128), stats for BN3 ---
        @pl.when(p == 2)
        def _pass2():
            a = bn_relu(h2_s[rows, :], H2) * m2_ref[...].astype(jnp.float32)
            h = jnp.dot(a.astype(jnp.bfloat16), w3_ref[...],
                        preferred_element_type=jnp.float32)
            accum_stats(h, H3_PAD)
            h3_s[rows, :] = h.astype(h3_s.dtype)

            @pl.when(i == last)
            def _():
                fold(H3_PAD, g3_ref[...], be3_ref[...], 1.0)

        # ---- pass 3: BN3+ReLU, Linear(64->32pad128)+bias, tanh --------------
        @pl.when(p == 3)
        def _pass3():
            a = bn_relu(h3_s[rows, :], H3_PAD)
            h = jnp.dot(a.astype(jnp.bfloat16), w4_ref[...],
                        preferred_element_type=jnp.float32) + b4_ref[...]
            out_ref[...] = jnp.tanh(h).astype(out_ref.dtype)

    return kernel


def _forward_fused(xp, m1, m2, params, n_real, tb):
    bpad = xp.shape[0]
    nt = bpad // tb

    def active_in(pass_idx):
        # Advance with the batch tile only during the pass that uses this
        # stream; collapse to block 0 otherwise so it is fetched just once.
        def index_map(p, i):
            return (jnp.where(p == pass_idx, i, 0), 0)
        return index_map

    const2 = lambda p, i: (0, 0)

    return pl.pallas_call(
        _make_fused_kernel(tb, n_real),
        grid=(4, nt),
        in_specs=[
            pl.BlockSpec((tb, IN_PAD), active_in(0)),       # x
            pl.BlockSpec((tb, H1), active_in(1)),           # mask 1 (int8)
            pl.BlockSpec((tb, H2), active_in(2)),           # mask 2 (int8)
            pl.BlockSpec((IN_PAD, H1), const2),             # w1
            pl.BlockSpec((H1, H2), const2),                 # w2
            pl.BlockSpec((H2, H3_PAD), const2),             # w3
            pl.BlockSpec((H3_PAD, OUT_PAD), const2),        # w4
            pl.BlockSpec((1, OUT_PAD), const2),             # b4
            pl.BlockSpec((1, H1), const2),                  # gamma1
            pl.BlockSpec((1, H1), const2),                  # beta1
            pl.BlockSpec((1, H2), const2),                  # gamma2
            pl.BlockSpec((1, H2), const2),                  # beta2
            pl.BlockSpec((1, H3_PAD), const2),              # gamma3
            pl.BlockSpec((1, H3_PAD), const2),              # beta3
        ],
        out_specs=pl.BlockSpec((tb, OUT_PAD), active_in(3)),
        out_shape=jax.ShapeDtypeStruct((bpad, OUT_PAD), jnp.bfloat16),
        scratch_shapes=[
            pltpu.VMEM((bpad, H1), jnp.bfloat16),     # h1
            pltpu.VMEM((bpad, H2), jnp.bfloat16),     # h2
            pltpu.VMEM((bpad, H3_PAD), jnp.bfloat16), # h3
            pltpu.VMEM((1, H1), jnp.float32),         # sum
            pltpu.VMEM((1, H1), jnp.float32),         # sum of squares
            pltpu.VMEM((1, H1), jnp.float32),         # folded BN scale
            pltpu.VMEM((1, H1), jnp.float32),         # folded BN shift
        ],
        compiler_params=pltpu.CompilerParams(
            dimension_semantics=("arbitrary", "arbitrary"),
            vmem_limit_bytes=VMEM_LIMIT_BYTES),
    )(xp, m1, m2, params["w1"], params["w2"], params["w3"], params["w4"],
      params["b4"], params["g1"], params["be1"], params["g2"], params["be2"],
      params["g3"], params["be3"])


# ---------------------------------------------------------------------------
# Tiled path (large batches): 4 calls, per-tile partial BN stats, all parallel
# ---------------------------------------------------------------------------
def linear_stats_kernel(x_ref, w_ref, h_ref, sum_ref, sq_ref):
    h = jnp.dot(x_ref[...], w_ref[...], preferred_element_type=jnp.float32)
    sum_ref[...] = jnp.sum(h, axis=0, keepdims=True)[None]
    sq_ref[...] = jnp.sum(h * h, axis=0, keepdims=True)[None]
    h_ref[...] = h.astype(h_ref.dtype)


def bn_drop_linear_kernel(h_ref, sc_ref, sh_ref, m_ref, w_ref,
                          o_ref, sum_ref, sq_ref):
    a = jnp.maximum(
        h_ref[...].astype(jnp.float32) * sc_ref[...] + sh_ref[...], 0.0)
    a = a * m_ref[...].astype(jnp.float32)
    h = jnp.dot(a.astype(w_ref.dtype), w_ref[...],
                preferred_element_type=jnp.float32)
    sum_ref[...] = jnp.sum(h, axis=0, keepdims=True)[None]
    sq_ref[...] = jnp.sum(h * h, axis=0, keepdims=True)[None]
    o_ref[...] = h.astype(o_ref.dtype)


def bn_linear_tanh_kernel(h_ref, sc_ref, sh_ref, w_ref, b_ref, o_ref):
    a = jnp.maximum(
        h_ref[...].astype(jnp.float32) * sc_ref[...] + sh_ref[...], 0.0)
    h = jnp.dot(a.astype(w_ref.dtype), w_ref[...],
                preferred_element_type=jnp.float32) + b_ref[...]
    o_ref[...] = jnp.tanh(h).astype(o_ref.dtype)


def _bn_fold(sum_parts, sq_parts, n, gamma, beta, post_scale):
    s = jnp.sum(sum_parts, axis=0)        # (1, F) from (num_tiles, 1, F)
    q = jnp.sum(sq_parts, axis=0)
    mu = s / n
    var = jnp.maximum(q / n - mu * mu, 0.0)
    ginv = gamma * jax.lax.rsqrt(var + BN_EPS)
    return post_scale * ginv, post_scale * (beta - mu * ginv)


def _forward_tiled(xp, m1, m2, params, n_real, tb):
    bpad = xp.shape[0]
    nt = bpad // tb
    n = float(n_real)

    def row(cols, buffered=False):
        if buffered:
            return pl.BlockSpec((tb, cols), lambda i: (i, 0),
                                pipeline_mode=pl.Buffered(3))
        return pl.BlockSpec((tb, cols), lambda i: (i, 0))

    def const(rows, cols):
        return pl.BlockSpec((rows, cols), lambda i: (0, 0))

    def stats_out(cols):
        return (pl.BlockSpec((tb, cols), lambda i: (i, 0)),
                pl.BlockSpec((1, 1, cols), lambda i: (i, 0, 0)),
                pl.BlockSpec((1, 1, cols), lambda i: (i, 0, 0)))

    def stats_shape(cols):
        return (jax.ShapeDtypeStruct((bpad, cols), jnp.bfloat16),
                jax.ShapeDtypeStruct((nt, 1, cols), jnp.float32),
                jax.ShapeDtypeStruct((nt, 1, cols), jnp.float32))

    cp = pltpu.CompilerParams(dimension_semantics=("parallel",),
                              vmem_limit_bytes=VMEM_LIMIT_BYTES)

    h1, s1, q1 = pl.pallas_call(
        linear_stats_kernel, grid=(nt,),
        in_specs=[row(IN_PAD), const(IN_PAD, H1)],
        out_specs=stats_out(H1), out_shape=stats_shape(H1),
        compiler_params=cp,
    )(xp, params["w1"])
    sc1, sh1 = _bn_fold(s1, q1, n, params["g1"], params["be1"], 2.0)

    h2, s2, q2 = pl.pallas_call(
        bn_drop_linear_kernel, grid=(nt,),
        in_specs=[row(H1, buffered=True), const(1, H1), const(1, H1),
                  row(H1), const(H1, H2)],
        out_specs=stats_out(H2), out_shape=stats_shape(H2),
        compiler_params=cp,
    )(h1, sc1, sh1, m1, params["w2"])
    sc2, sh2 = _bn_fold(s2, q2, n, params["g2"], params["be2"], 2.0)

    h3, s3, q3 = pl.pallas_call(
        bn_drop_linear_kernel, grid=(nt,),
        in_specs=[row(H2, buffered=True), const(1, H2), const(1, H2),
                  row(H2), const(H2, H3_PAD)],
        out_specs=stats_out(H3_PAD), out_shape=stats_shape(H3_PAD),
        compiler_params=cp,
    )(h2, sc2, sh2, m2, params["w3"])
    sc3, sh3 = _bn_fold(s3, q3, n, params["g3"], params["be3"], 1.0)

    out = pl.pallas_call(
        bn_linear_tanh_kernel, grid=(nt,),
        in_specs=[row(H3_PAD, buffered=True), const(1, H3_PAD), const(1, H3_PAD),
                  const(H3_PAD, OUT_PAD), const(1, OUT_PAD)],
        out_specs=pl.BlockSpec((tb, OUT_PAD), lambda i: (i, 0)),
        out_shape=jax.ShapeDtypeStruct((bpad, OUT_PAD), jnp.bfloat16),
        compiler_params=cp,
    )(h3, sc3, sh3, params["w4"], params["b4"])
    return out


# ---------------------------------------------------------------------------
# Parameters (synthetic, pre-padded, MXU operands stored in bf16)
# ---------------------------------------------------------------------------
def init_params(key):
    """Weights are (in_features, out_features) — transposed vs nn.Linear.weight.
    b1..b3 omitted: a bias feeding training-mode BatchNorm is an exact no-op."""
    ks = jax.random.split(key, 11)

    def dense(k, din, dout):
        return jax.random.normal(k, (din, dout), jnp.float32) / jnp.sqrt(din)

    w1 = dense(ks[0], IN_DIM, H1)
    w2 = dense(ks[1], H1, H2)
    w3 = dense(ks[2], H2, H3)
    w4 = dense(ks[3], H3, DATA_DIM)
    b4 = 0.05 * jax.random.normal(ks[4], (1, DATA_DIM), jnp.float32)
    g1 = 1.0 + 0.1 * jax.random.normal(ks[5], (1, H1), jnp.float32)
    g2 = 1.0 + 0.1 * jax.random.normal(ks[6], (1, H2), jnp.float32)
    g3 = 1.0 + 0.1 * jax.random.normal(ks[7], (1, H3), jnp.float32)
    be1 = 0.05 * jax.random.normal(ks[8], (1, H1), jnp.float32)
    be2 = 0.05 * jax.random.normal(ks[9], (1, H2), jnp.float32)
    be3 = 0.05 * jax.random.normal(ks[10], (1, H3), jnp.float32)

    def pad2(a, rows, cols):
        return jnp.zeros((rows, cols), a.dtype).at[:a.shape[0], :a.shape[1]].set(a)

    return {
        "w1": pad2(w1, IN_PAD, H1).astype(jnp.bfloat16),
        "w2": w2.astype(jnp.bfloat16),
        "w3": pad2(w3, H2, H3_PAD).astype(jnp.bfloat16),
        "w4": pad2(w4, H3_PAD, OUT_PAD).astype(jnp.bfloat16),
        "b4": pad2(b4, 1, OUT_PAD),
        "g1": g1, "be1": be1,
        "g2": g2, "be2": be2,
        "g3": pad2(g3, 1, H3_PAD), "be3": pad2(be3, 1, H3_PAD),
    }


# ---------------------------------------------------------------------------
# Forward pass
# ---------------------------------------------------------------------------
def generator_forward(z, y, params, key, *, path="auto"):
    b = z.shape[0]
    tb = _choose_batch_tile(b)
    bpad = _round_up(b, tb)

    x = jnp.concatenate([z.astype(jnp.float32), y.astype(jnp.float32)], axis=1)
    xp = jnp.zeros((bpad, IN_PAD), jnp.bfloat16)
    xp = xp.at[:b, :IN_DIM].set(x.astype(jnp.bfloat16))

    keep1, keep2 = _dropout_masks(key, b)
    # Pad rows stay 0: their activations vanish, so BN batch stats (divided by
    # the real batch size) are exact for padded batches.
    m1 = jnp.zeros((bpad, H1), jnp.int8).at[:b].set(keep1)
    m2 = jnp.zeros((bpad, H2), jnp.int8).at[:b].set(keep2)

    if path == "fused" or (path == "auto" and bpad <= FUSED_MAX_ROWS):
        out = _forward_fused(xp, m1, m2, params, b, tb)
    else:
        out = _forward_tiled(xp, m1, m2, params, b, tb)
    return out[:b, :DATA_DIM].astype(jnp.float32)


# ---------------------------------------------------------------------------
# Pure-JAX reference (mirrors the kernels' bf16 quantization points)
# ---------------------------------------------------------------------------
def generator_reference(z, y, params, key):
    f32, bf16 = jnp.float32, jnp.bfloat16
    b = z.shape[0]
    x = jnp.concatenate([z, y], axis=1).astype(f32)
    xp = jnp.zeros((b, IN_PAD), f32).at[:, :IN_DIM].set(x)
    keep1, keep2 = _dropout_masks(key, b)

    def dot16(a, w):
        return jnp.dot(a.astype(bf16), w, preferred_element_type=f32)

    def bn_relu(h_stats, h_apply, gamma, beta):
        mu = jnp.mean(h_stats, axis=0, keepdims=True)
        var = jnp.mean(jnp.square(h_stats - mu), axis=0, keepdims=True)
        return jnp.maximum(
            (h_apply - mu) * jax.lax.rsqrt(var + BN_EPS) * gamma + beta, 0.0)

    rt = lambda h: h.astype(bf16).astype(f32)   # bf16 round-trip of intermediates

    h1 = dot16(xp, params["w1"])
    a1 = bn_relu(h1, rt(h1), params["g1"], params["be1"]) * (2.0 * keep1.astype(f32))
    h2 = dot16(a1, params["w2"])
    a2 = bn_relu(h2, rt(h2), params["g2"], params["be2"]) * (2.0 * keep2.astype(f32))
    h3 = dot16(a2, params["w3"])
    a3 = bn_relu(h3, rt(h3), params["g3"], params["be3"])
    out = jnp.tanh(dot16(a3, params["w4"]) + params["b4"])
    return out[:, :DATA_DIM]


# ---------------------------------------------------------------------------
if __name__ == "__main__":
    root = jax.random.PRNGKey(0)
    k_param, k_z, k_y, k_drop = jax.random.split(root, 4)

    params = init_params(k_param)

    batch = 8   # small demo batch
    z = jax.random.normal(k_z, (batch, LATENT_DIM), jnp.float32)
    labels = jax.random.randint(k_y, (batch,), 0, N_CLASSES)
    y = jax.nn.one_hot(labels, N_CLASSES, dtype=jnp.float32)

    ref = generator_reference(z, y, params, k_drop)

    # Fused single-call path (default for small/medium batches).
    fwd_fused = jax.jit(functools.partial(generator_forward, path="fused"))
    out_fused = jax.block_until_ready(fwd_fused(z, y, params, k_drop))
    assert out_fused.shape == (batch, DATA_DIM)
    assert bool(jnp.all(jnp.isfinite(out_fused)))
    assert bool(jnp.all(jnp.abs(out_fused) <= 1.0))                 # tanh range
    assert bool(jnp.max(jnp.abs(out_fused - ref)) < 5e-2), "fused path mismatch"

    # Multi-call tiled path (used automatically for large batches).
    fwd_tiled = jax.jit(functools.partial(generator_forward, path="tiled"))
    out_tiled = jax.block_until_ready(fwd_tiled(z, y, params, k_drop))
    assert out_tiled.shape == (batch, DATA_DIM)
    assert bool(jnp.max(jnp.abs(out_tiled - ref)) < 5e-2), "tiled path mismatch"

    print("KERNEL_OK")
</pallas_src>

<mosaic_0001>
module attributes {stable_mosaic.version = 11 : i64} {
  func.func @kernel(%arg0: i32, %arg1: i32, %arg2: memref<32x128xbf16, #tpu.memory_space<vmem>>, %arg3: memref<32x256xi8, #tpu.memory_space<vmem>>, %arg4: memref<32x128xi8, #tpu.memory_space<vmem>>, %arg5: memref<128x256xbf16, #tpu.memory_space<vmem>>, %arg6: memref<256x128xbf16, #tpu.memory_space<vmem>>, %arg7: memref<128x128xbf16, #tpu.memory_space<vmem>>, %arg8: memref<128x128xbf16, #tpu.memory_space<vmem>>, %arg9: memref<1x128xf32, #tpu.memory_space<vmem>>, %arg10: memref<1x256xf32, #tpu.memory_space<vmem>>, %arg11: memref<1x256xf32, #tpu.memory_space<vmem>>, %arg12: memref<1x128xf32, #tpu.memory_space<vmem>>, %arg13: memref<1x128xf32, #tpu.memory_space<vmem>>, %arg14: memref<1x128xf32, #tpu.memory_space<vmem>>, %arg15: memref<1x128xf32, #tpu.memory_space<vmem>>, %arg16: memref<32x128xbf16, #tpu.memory_space<vmem>>, %arg17: memref<32x256xbf16, #tpu.memory_space<vmem>>, %arg18: memref<32x128xbf16, #tpu.memory_space<vmem>>, %arg19: memref<32x128xbf16, #tpu.memory_space<vmem>>, %arg20: memref<1x256xf32, #tpu.memory_space<vmem>>, %arg21: memref<1x256xf32, #tpu.memory_space<vmem>>, %arg22: memref<1x256xf32, #tpu.memory_space<vmem>>, %arg23: memref<1x256xf32, #tpu.memory_space<vmem>>) attributes {dimension_semantics = [#tpu.dimension_semantics<arbitrary>, #tpu.dimension_semantics<arbitrary>], iteration_bounds = array<i64: 4, 1>, scalar_prefetch = 0 : i64, scratch_operands = 7 : i64, tpu.core_type = #tpu.core_type<tc>, window_params = [{transform_indices = @transform_0, window_bounds = array<i64: 32, 128>}, {transform_indices = @transform_1, window_bounds = array<i64: 32, 256>}, {transform_indices = @transform_2, window_bounds = array<i64: 32, 128>}, {pipeline_mode = #tpu.pipeline_mode<synchronous>, transform_indices = @transform_3, window_bounds = array<i64: 128, 256>}, {pipeline_mode = #tpu.pipeline_mode<synchronous>, transform_indices = @transform_4, window_bounds = array<i64: 256, 128>}, {pipeline_mode = #tpu.pipeline_mode<synchronous>, transform_indices = @transform_5, window_bounds = array<i64: 128, 128>}, {pipeline_mode = #tpu.pipeline_mode<synchronous>, transform_indices = @transform_6, window_bounds = array<i64: 128, 128>}, {pipeline_mode = #tpu.pipeline_mode<synchronous>, transform_indices = @transform_7, window_bounds = array<i64: 1, 128>}, {pipeline_mode = #tpu.pipeline_mode<synchronous>, transform_indices = @transform_8, window_bounds = array<i64: 1, 256>}, {pipeline_mode = #tpu.pipeline_mode<synchronous>, transform_indices = @transform_9, window_bounds = array<i64: 1, 256>}, {pipeline_mode = #tpu.pipeline_mode<synchronous>, transform_indices = @transform_10, window_bounds = array<i64: 1, 128>}, {pipeline_mode = #tpu.pipeline_mode<synchronous>, transform_indices = @transform_11, window_bounds = array<i64: 1, 128>}, {pipeline_mode = #tpu.pipeline_mode<synchronous>, transform_indices = @transform_12, window_bounds = array<i64: 1, 128>}, {pipeline_mode = #tpu.pipeline_mode<synchronous>, transform_indices = @transform_13, window_bounds = array<i64: 1, 128>}, {transform_indices = @transform_14, window_bounds = array<i64: 32, 128>}]} {
    %c32_i32 = arith.constant 32 : i32
    %0 = arith.muli %arg1, %c32_i32 : i32
    %1 = tpu.assume_multiple %0, 32 : i32
    %c0_i32 = arith.constant 0 : i32
    %2 = arith.cmpi eq, %arg0, %c0_i32 : i32
    %3 = arith.extui %2 : i1 to i32
    %c0_i32_0 = arith.constant 0 : i32
    %4 = arith.cmpi ne, %3, %c0_i32_0 : i32
    scf.if %4 {
      %c0 = arith.constant 0 : index
      %c0_4 = arith.constant 0 : index
      %14 = vector.load %arg2[%c0, %c0_4] : memref<32x128xbf16, #tpu.memory_space<vmem>>, vector<32x128xbf16>
      %c0_5 = arith.constant 0 : index
      %c0_6 = arith.constant 0 : index
      %15 = vector.load %arg5[%c0_5, %c0_6] : memref<128x256xbf16, #tpu.memory_space<vmem>>, vector<128x256xbf16>
      %cst = arith.constant dense<0.000000e+00> : vector<32x256xf32>
      %16 = tpu.matmul %14, %15, %cst {dimension_numbers = #tpu.dot_dimension_numbers<[1], [0], [0], [1], [0, 0, 1, 1], [], []>} : vector<32x128xbf16>, vector<128x256xbf16>, vector<32x256xf32> -> vector<32x256xf32>
      %cst_7 = arith.constant dense<0.000000e+00> : vector<256xf32>
      %17 = vector.multi_reduction <add>, %16, %cst_7 [0] : vector<32x256xf32> to vector<256xf32>
      %18 = vector.shape_cast %17 : vector<256xf32> to vector<1x256xf32>
      %19 = arith.mulf %16, %16 : vector<32x256xf32>
      %cst_8 = arith.constant dense<0.000000e+00> : vector<256xf32>
      %20 = vector.multi_reduction <add>, %19, %cst_8 [0] : vector<32x256xf32> to vector<256xf32>
      %21 = vector.shape_cast %20 : vector<256xf32> to vector<1x256xf32>
      %c0_i32_9 = arith.constant 0 : i32
      %22 = arith.cmpi eq, %arg1, %c0_i32_9 : i32
      %23 = arith.extui %22 : i1 to i32
      %c0_i32_10 = arith.constant 0 : i32
      %24 = arith.cmpi ne, %23, %c0_i32_10 : i32
      scf.if %24 {
        %c0_16 = arith.constant 0 : index
        %c0_17 = arith.constant 0 : index
        %34 = vector.load %arg20[%c0_16, %c0_17] : memref<1x256xf32, #tpu.memory_space<vmem>>, vector<1x256xf32>
        tpu.vector_store %arg20[%c0_16, %c0_17], %18 {strides = array<i32>} : memref<1x256xf32, #tpu.memory_space<vmem>>, vector<1x256xf32>,
        %c0_18 = arith.constant 0 : index
        %c0_19 = arith.constant 0 : index
        %35 = vector.load %arg21[%c0_18, %c0_19] : memref<1x256xf32, #tpu.memory_space<vmem>>, vector<1x256xf32>
        tpu.vector_store %arg21[%c0_18, %c0_19], %21 {strides = array<i32>} : memref<1x256xf32, #tpu.memory_space<vmem>>, vector<1x256xf32>,
      } else {
      }
      %c0_i32_11 = arith.constant 0 : i32
      %25 = arith.cmpi ne, %arg1, %c0_i32_11 : i32
      %26 = arith.extui %25 : i1 to i32
      %c0_i32_12 = arith.constant 0 : i32
      %27 = arith.cmpi ne, %26, %c0_i32_12 : i32
      scf.if %27 {
        %c0_16 = arith.constant 0 : index
        %c0_17 = arith.constant 0 : index
        %34 = vector.load %arg20[%c0_16, %c0_17] : memref<1x256xf32, #tpu.memory_space<vmem>>, vector<1x256xf32>
        %35 = arith.addf %34, %18 : vector<1x256xf32>
        %c0_18 = arith.constant 0 : index
        %c0_19 = arith.constant 0 : index
        %36 = vector.load %arg20[%c0_18, %c0_19] : memref<1x256xf32, #tpu.memory_space<vmem>>, vector<1x256xf32>
        tpu.vector_store %arg20[%c0_18, %c0_19], %35 {strides = array<i32>} : memref<1x256xf32, #tpu.memory_space<vmem>>, vector<1x256xf32>,
        %c0_20 = arith.constant 0 : index
        %c0_21 = arith.constant 0 : index
        %37 = vector.load %arg21[%c0_20, %c0_21] : memref<1x256xf32, #tpu.memory_space<vmem>>, vector<1x256xf32>
        %38 = arith.addf %37, %21 : vector<1x256xf32>
        %c0_22 = arith.constant 0 : index
        %c0_23 = arith.constant 0 : index
        %39 = vector.load %arg21[%c0_22, %c0_23] : memref<1x256xf32, #tpu.memory_space<vmem>>, vector<1x256xf32>
        tpu.vector_store %arg21[%c0_22, %c0_23], %38 {strides = array<i32>} : memref<1x256xf32, #tpu.memory_space<vmem>>, vector<1x256xf32>,
      } else {
      }
      %28 = arith.truncf %16 : vector<32x256xf32> to vector<32x256xbf16>
      %29 = arith.index_cast %1 : i32 to index
      %c0_13 = arith.constant 0 : index
      %30 = vector.load %arg17[%29, %c0_13] : memref<32x256xbf16, #tpu.memory_space<vmem>>, vector<32x256xbf16>
      tpu.vector_store %arg17[%29, %c0_13], %28 {strides = array<i32>} : memref<32x256xbf16, #tpu.memory_space<vmem>>, vector<32x256xbf16>,
      %c0_i32_14 = arith.constant 0 : i32
      %31 = arith.cmpi eq, %arg1, %c0_i32_14 : i32
      %32 = arith.extui %31 : i1 to i32
      %c0_i32_15 = arith.constant 0 : i32
      %33 = arith.cmpi ne, %32, %c0_i32_15 : i32
      scf.if %33 {
        %c0_16 = arith.constant 0 : index
        %c0_17 = arith.constant 0 : index
        %34 = vector.load %arg10[%c0_16, %c0_17] : memref<1x256xf32, #tpu.memory_space<vmem>>, vector<1x256xf32>
        %c0_18 = arith.constant 0 : index
        %c0_19 = arith.constant 0 : index
        %35 = vector.load %arg11[%c0_18, %c0_19] : memref<1x256xf32, #tpu.memory_space<vmem>>, vector<1x256xf32>
        %c0_20 = arith.constant 0 : index
        %c0_21 = arith.constant 0 : index
        %36 = vector.load %arg20[%c0_20, %c0_21] : memref<1x256xf32, #tpu.memory_space<vmem>>, vector<1x256xf32>
        %cst_22 = arith.constant 1.250000e-01 : f32
        %37 = vector.broadcast %cst_22 : f32 to vector<1x256xf32>
        %38 = arith.mulf %36, %37 : vector<1x256xf32>
        %c0_23 = arith.constant 0 : index
        %c0_24 = arith.constant 0 : index
        %39 = vector.load %arg21[%c0_23, %c0_24] : memref<1x256xf32, #tpu.memory_space<vmem>>, vector<1x256xf32>
        %cst_25 = arith.constant 1.250000e-01 : f32
        %40 = vector.broadcast %cst_25 : f32 to vector<1x256xf32>
        %41 = arith.mulf %39, %40 : vector<1x256xf32>
        %42 = arith.mulf %38, %38 : vector<1x256xf32>
        %43 = arith.subf %41, %42 : vector<1x256xf32>
        %cst_26 = arith.constant 0.000000e+00 : f32
        %44 = vector.broadcast %cst_26 : f32 to vector<1x256xf32>
        %45 = arith.maximumf %43, %44 : vector<1x256xf32>
        %cst_27 = arith.constant 9.99999974E-6 : f32
        %46 = vector.broadcast %cst_27 : f32 to vector<1x256xf32>
        %47 = arith.addf %45, %46 : vector<1x256xf32>
        %48 = math.rsqrt %47 : vector<1x256xf32>
        %49 = arith.mulf %34, %48 : vector<1x256xf32>
        %cst_28 = arith.constant 2.000000e+00 : f32
        %50 = vector.broadcast %cst_28 : f32 to vector<1x256xf32>
        %51 = arith.mulf %50, %49 : vector<1x256xf32>
        %c0_29 = arith.constant 0 : index
        %c0_30 = arith.constant 0 : index
        %52 = vector.load %arg22[%c0_29, %c0_30] : memref<1x256xf32, #tpu.memory_space<vmem>>, vector<1x256xf32>
        tpu.vector_store %arg22[%c0_29, %c0_30], %51 {strides = array<i32>} : memref<1x256xf32, #tpu.memory_space<vmem>>, vector<1x256xf32>,
        %53 = arith.mulf %38, %49 : vector<1x256xf32>
        %54 = arith.subf %35, %53 : vector<1x256xf32>
        %cst_31 = arith.constant 2.000000e+00 : f32
        %55 = vector.broadcast %cst_31 : f32 to vector<1x256xf32>
        %56 = arith.mulf %55, %54 : vector<1x256xf32>
        %c0_32 = arith.constant 0 : index
        %c0_33 = arith.constant 0 : index
        %57 = vector.load %arg23[%c0_32, %c0_33] : memref<1x256xf32, #tpu.memory_space<vmem>>, vector<1x256xf32>
        tpu.vector_store %arg23[%c0_32, %c0_33], %56 {strides = array<i32>} : memref<1x256xf32, #tpu.memory_space<vmem>>, vector<1x256xf32>,
      } else {
      }
    } else {
    }
    %c1_i32 = arith.constant 1 : i32
    %5 = arith.cmpi eq, %arg0, %c1_i32 : i32
    %6 = arith.extui %5 : i1 to i32
    %c0_i32_1 = arith.constant 0 : i32
    %7 = arith.cmpi ne, %6, %c0_i32_1 : i32
    scf.if %7 {
      %14 = arith.index_cast %1 : i32 to index
      %c0 = arith.constant 0 : index
      %15 = vector.load %arg17[%14, %c0] : memref<32x256xbf16, #tpu.memory_space<vmem>>, vector<32x256xbf16>
      %16 = arith.extf %15 : vector<32x256xbf16> to vector<32x256xf32>
      %c0_4 = arith.constant 0 : index
      %c0_5 = arith.constant 0 : index
      %17 = vector.load %arg22[%c0_4, %c0_5] : memref<1x256xf32, #tpu.memory_space<vmem>>, vector<1x256xf32>
      %18 = vector.broadcast %17 : vector<1x256xf32> to vector<32x256xf32>
      %19 = arith.mulf %16, %18 : vector<32x256xf32>
      %c0_6 = arith.constant 0 : index
      %c0_7 = arith.constant 0 : index
      %20 = vector.load %arg23[%c0_6, %c0_7] : memref<1x256xf32, #tpu.memory_space<vmem>>, vector<1x256xf32>
      %21 = vector.broadcast %20 : vector<1x256xf32> to vector<32x256xf32>
      %22 = arith.addf %19, %21 : vector<32x256xf32>
      %cst = arith.constant 0.000000e+00 : f32
      %23 = vector.broadcast %cst : f32 to vector<32x256xf32>
      %24 = arith.maximumf %22, %23 : vector<32x256xf32>
      %c0_8 = arith.constant 0 : index
      %c0_9 = arith.constant 0 : index
      %25 = vector.load %arg3[%c0_8, %c0_9] : memref<32x256xi8, #tpu.memory_space<vmem>>, vector<32x256xi8>
      %26 = arith.sitofp %25 : vector<32x256xi8> to vector<32x256xf32>
      %27 = arith.mulf %24, %26 : vector<32x256xf32>
      %28 = arith.truncf %27 : vector<32x256xf32> to vector<32x256xbf16>
      %c0_10 = arith.constant 0 : index
      %c0_11 = arith.constant 0 : index
      %29 = vector.load %arg6[%c0_10, %c0_11] : memref<256x128xbf16, #tpu.memory_space<vmem>>, vector<256x128xbf16>
      %cst_12 = arith.constant dense<0.000000e+00> : vector<32x128xf32>
      %30 = tpu.matmul %28, %29, %cst_12 {dimension_numbers = #tpu.dot_dimension_numbers<[1], [0], [0], [1], [0, 0, 1, 1], [], []>} : vector<32x256xbf16>, vector<256x128xbf16>, vector<32x128xf32> -> vector<32x128xf32>
      %cst_13 = arith.constant dense<0.000000e+00> : vector<128xf32>
      %31 = vector.multi_reduction <add>, %30, %cst_13 [0] : vector<32x128xf32> to vector<128xf32>
      %32 = vector.shape_cast %31 : vector<128xf32> to vector<1x128xf32>
      %33 = arith.mulf %30, %30 : vector<32x128xf32>
      %cst_14 = arith.constant dense<0.000000e+00> : vector<128xf32>
      %34 = vector.multi_reduction <add>, %33, %cst_14 [0] : vector<32x128xf32> to vector<128xf32>
      %35 = vector.shape_cast %34 : vector<128xf32> to vector<1x128xf32>
      %c0_i32_15 = arith.constant 0 : i32
      %36 = arith.cmpi eq, %arg1, %c0_i32_15 : i32
      %37 = arith.extui %36 : i1 to i32
      %c0_i32_16 = arith.constant 0 : i32
      %38 = arith.cmpi ne, %37, %c0_i32_16 : i32
      scf.if %38 {
        %c0_22 = arith.constant 0 : index
        %c0_23 = arith.constant 0 : index
        %48 = vector.load %arg20[%c0_22, %c0_23] : memref<1x256xf32, #tpu.memory_space<vmem>>, vector<1x128xf32>
        tpu.vector_store %arg20[%c0_22, %c0_23], %32 {strides = array<i32>} : memref<1x256xf32, #tpu.memory_space<vmem>>, vector<1x128xf32>,
        %c0_24 = arith.constant 0 : index
        %c0_25 = arith.constant 0 : index
        %49 = vector.load %arg21[%c0_24, %c0_25] : memref<1x256xf32, #tpu.memory_space<vmem>>, vector<1x128xf32>
        tpu.vector_store %arg21[%c0_24, %c0_25], %35 {strides = array<i32>} : memref<1x256xf32, #tpu.memory_space<vmem>>, vector<1x128xf32>,
      } else {
      }
      %c0_i32_17 = arith.constant 0 : i32
      %39 = arith.cmpi ne, %arg1, %c0_i32_17 : i32
      %40 = arith.extui %39 : i1 to i32
      %c0_i32_18 = arith.constant 0 : i32
      %41 = arith.cmpi ne, %40, %c0_i32_18 : i32
      scf.if %41 {
        %c0_22 = arith.constant 0 : index
        %c0_23 = arith.constant 0 : index
        %48 = vector.load %arg20[%c0_22, %c0_23] : memref<1x256xf32, #tpu.memory_space<vmem>>, vector<1x128xf32>
        %49 = arith.addf %48, %32 : vector<1x128xf32>
        %c0_24 = arith.constant 0 : index
        %c0_25 = arith.constant 0 : index
        %50 = vector.load %arg20[%c0_24, %c0_25] : memref<1x256xf32, #tpu.memory_space<vmem>>, vector<1x128xf32>
        tpu.vector_store %arg20[%c0_24, %c0_25], %49 {strides = array<i32>} : memref<1x256xf32, #tpu.memory_space<vmem>>, vector<1x128xf32>,
        %c0_26 = arith.constant 0 : index
        %c0_27 = arith.constant 0 : index
        %51 = vector.load %arg21[%c0_26, %c0_27] : memref<1x256xf32, #tpu.memory_space<vmem>>, vector<1x128xf32>
        %52 = arith.addf %51, %35 : vector<1x128xf32>
        %c0_28 = arith.constant 0 : index
        %c0_29 = arith.constant 0 : index
        %53 = vector.load %arg21[%c0_28, %c0_29] : memref<1x256xf32, #tpu.memory_space<vmem>>, vector<1x128xf32>
        tpu.vector_store %arg21[%c0_28, %c0_29], %52 {strides = array<i32>} : memref<1x256xf32, #tpu.memory_space<vmem>>, vector<1x128xf32>,
      } else {
      }
      %42 = arith.truncf %30 : vector<32x128xf32> to vector<32x128xbf16>
      %43 = arith.index_cast %1 : i32 to index
      %c0_19 = arith.constant 0 : index
      %44 = vector.load %arg18[%43, %c0_19] : memref<32x128xbf16, #tpu.memory_space<vmem>>, vector<32x128xbf16>
      tpu.vector_store %arg18[%43, %c0_19], %42 {strides = array<i32>} : memref<32x128xbf16, #tpu.memory_space<vmem>>, vector<32x128xbf16>,
      %c0_i32_20 = arith.constant 0 : i32
      %45 = arith.cmpi eq, %arg1, %c0_i32_20 : i32
      %46 = arith.extui %45 : i1 to i32
      %c0_i32_21 = arith.constant 0 : i32
      %47 = arith.cmpi ne, %46, %c0_i32_21 : i32
      scf.if %47 {
        %c0_22 = arith.constant 0 : index
        %c0_23 = arith.constant 0 : index
        %48 = vector.load %arg12[%c0_22, %c0_23] : memref<1x128xf32, #tpu.memory_space<vmem>>, vector<1x128xf32>
        %c0_24 = arith.constant 0 : index
        %c0_25 = arith.constant 0 : index
        %49 = vector.load %arg13[%c0_24, %c0_25] : memref<1x128xf32, #tpu.memory_space<vmem>>, vector<1x128xf32>
        %c0_26 = arith.constant 0 : index
        %c0_27 = arith.constant 0 : index
        %50 = vector.load %arg20[%c0_26, %c0_27] : memref<1x256xf32, #tpu.memory_space<vmem>>, vector<1x128xf32>
        %cst_28 = arith.constant 1.250000e-01 : f32
        %51 = vector.broadcast %cst_28 : f32 to vector<1x128xf32>
        %52 = arith.mulf %50, %51 : vector<1x128xf32>
        %c0_29 = arith.constant 0 : index
        %c0_30 = arith.constant 0 : index
        %53 = vector.load %arg21[%c0_29, %c0_30] : memref<1x256xf32, #tpu.memory_space<vmem>>, vector<1x128xf32>
        %cst_31 = arith.constant 1.250000e-01 : f32
        %54 = vector.broadcast %cst_31 : f32 to vector<1x128xf32>
        %55 = arith.mulf %53, %54 : vector<1x128xf32>
        %56 = arith.mulf %52, %52 : vector<1x128xf32>
        %57 = arith.subf %55, %56 : vector<1x128xf32>
        %cst_32 = arith.constant 0.000000e+00 : f32
        %58 = vector.broadcast %cst_32 : f32 to vector<1x128xf32>
        %59 = arith.maximumf %57, %58 : vector<1x128xf32>
        %cst_33 = arith.constant 9.99999974E-6 : f32
        %60 = vector.broadcast %cst_33 : f32 to vector<1x128xf32>
        %61 = arith.addf %59, %60 : vector<1x128xf32>
        %62 = math.rsqrt %61 : vector<1x128xf32>
        %63 = arith.mulf %48, %62 : vector<1x128xf32>
        %cst_34 = arith.constant 2.000000e+00 : f32
        %64 = vector.broadcast %cst_34 : f32 to vector<1x128xf32>
        %65 = arith.mulf %64, %63 : vector<1x128xf32>
        %c0_35 = arith.constant 0 : index
        %c0_36 = arith.constant 0 : index
        %66 = vector.load %arg22[%c0_35, %c0_36] : memref<1x256xf32, #tpu.memory_space<vmem>>, vector<1x128xf32>
        tpu.vector_store %arg22[%c0_35, %c0_36], %65 {strides = array<i32>} : memref<1x256xf32, #tpu.memory_space<vmem>>, vector<1x128xf32>,
        %67 = arith.mulf %52, %63 : vector<1x128xf32>
        %68 = arith.subf %49, %67 : vector<1x128xf32>
        %cst_37 = arith.constant 2.000000e+00 : f32
        %69 = vector.broadcast %cst_37 : f32 to vector<1x128xf32>
        %70 = arith.mulf %69, %68 : vector<1x128xf32>
        %c0_38 = arith.constant 0 : index
        %c0_39 = arith.constant 0 : index
        %71 = vector.load %arg23[%c0_38, %c0_39] : memref<1x256xf32, #tpu.memory_space<vmem>>, vector<1x128xf32>
        tpu.vector_store %arg23[%c0_38, %c0_39], %70 {strides = array<i32>} : memref<1x256xf32, #tpu.memory_space<vmem>>, vector<1x128xf32>,
      } else {
      }
    } else {
    }
    %c2_i32 = arith.constant 2 : i32
    %8 = arith.cmpi eq, %arg0, %c2_i32 : i32
    %9 = arith.extui %8 : i1 to i32
    %c0_i32_2 = arith.constant 0 : i32
    %10 = arith.cmpi ne, %9, %c0_i32_2 : i32
    scf.if %10 {
      %14 = arith.index_cast %1 : i32 to index
      %c0 = arith.constant 0 : index
      %15 = vector.load %arg18[%14, %c0] : memref<32x128xbf16, #tpu.memory_space<vmem>>, vector<32x128xbf16>
      %16 = arith.extf %15 : vector<32x128xbf16> to vector<32x128xf32>
      %c0_4 = arith.constant 0 : index
      %c0_5 = arith.constant 0 : index
      %17 = vector.load %arg22[%c0_4, %c0_5] : memref<1x256xf32, #tpu.memory_space<vmem>>, vector<1x128xf32>
      %18 = vector.broadcast %17 : vector<1x128xf32> to vector<32x128xf32>
      %19 = arith.mulf %16, %18 : vector<32x128xf32>
      %c0_6 = arith.constant 0 : index
      %c0_7 = arith.constant 0 : index
      %20 = vector.load %arg23[%c0_6, %c0_7] : memref<1x256xf32, #tpu.memory_space<vmem>>, vector<1x128xf32>
      %21 = vector.broadcast %20 : vector<1x128xf32> to vector<32x128xf32>
      %22 = arith.addf %19, %21 : vector<32x128xf32>
      %cst = arith.constant 0.000000e+00 : f32
      %23 = vector.broadcast %cst : f32 to vector<32x128xf32>
      %24 = arith.maximumf %22, %23 : vector<32x128xf32>
      %c0_8 = arith.constant 0 : index
      %c0_9 = arith.constant 0 : index
      %25 = vector.load %arg4[%c0_8, %c0_9] : memref<32x128xi8, #tpu.memory_space<vmem>>, vector<32x128xi8>
      %26 = arith.sitofp %25 : vector<32x128xi8> to vector<32x128xf32>
      %27 = arith.mulf %24, %26 : vector<32x128xf32>
      %28 = arith.truncf %27 : vector<32x128xf32> to vector<32x128xbf16>
      %c0_10 = arith.constant 0 : index
      %c0_11 = arith.constant 0 : index
      %29 = vector.load %arg7[%c0_10, %c0_11] : memref<128x128xbf16, #tpu.memory_space<vmem>>, vector<128x128xbf16>
      %cst_12 = arith.constant dense<0.000000e+00> : vector<32x128xf32>
      %30 = tpu.matmul %28, %29, %cst_12 {dimension_numbers = #tpu.dot_dimension_numbers<[1], [0], [0], [1], [0, 0, 1, 1], [], []>} : vector<32x128xbf16>, vector<128x128xbf16>, vector<32x128xf32> -> vector<32x128xf32>
      %cst_13 = arith.constant dense<0.000000e+00> : vector<128xf32>
      %31 = vector.multi_reduction <add>, %30, %cst_13 [0] : vector<32x128xf32> to vector<128xf32>
      %32 = vector.shape_cast %31 : vector<128xf32> to vector<1x128xf32>
      %33 = arith.mulf %30, %30 : vector<32x128xf32>
      %cst_14 = arith.constant dense<0.000000e+00> : vector<128xf32>
      %34 = vector.multi_reduction <add>, %33, %cst_14 [0] : vector<32x128xf32> to vector<128xf32>
      %35 = vector.shape_cast %34 : vector<128xf32> to vector<1x128xf32>
      %c0_i32_15 = arith.constant 0 : i32
      %36 = arith.cmpi eq, %arg1, %c0_i32_15 : i32
      %37 = arith.extui %36 : i1 to i32
      %c0_i32_16 = arith.constant 0 : i32
      %38 = arith.cmpi ne, %37, %c0_i32_16 : i32
      scf.if %38 {
        %c0_22 = arith.constant 0 : index
        %c0_23 = arith.constant 0 : index
        %48 = vector.load %arg20[%c0_22, %c0_23] : memref<1x256xf32, #tpu.memory_space<vmem>>, vector<1x128xf32>
        tpu.vector_store %arg20[%c0_22, %c0_23], %32 {strides = array<i32>} : memref<1x256xf32, #tpu.memory_space<vmem>>, vector<1x128xf32>,
        %c0_24 = arith.constant 0 : index
        %c0_25 = arith.constant 0 : index
        %49 = vector.load %arg21[%c0_24, %c0_25] : memref<1x256xf32, #tpu.memory_space<vmem>>, vector<1x128xf32>
        tpu.vector_store %arg21[%c0_24, %c0_25], %35 {strides = array<i32>} : memref<1x256xf32, #tpu.memory_space<vmem>>, vector<1x128xf32>,
      } else {
      }
      %c0_i32_17 = arith.constant 0 : i32
      %39 = arith.cmpi ne, %arg1, %c0_i32_17 : i32
      %40 = arith.extui %39 : i1 to i32
      %c0_i32_18 = arith.constant 0 : i32
      %41 = arith.cmpi ne, %40, %c0_i32_18 : i32
      scf.if %41 {
        %c0_22 = arith.constant 0 : index
        %c0_23 = arith.constant 0 : index
        %48 = vector.load %arg20[%c0_22, %c0_23] : memref<1x256xf32, #tpu.memory_space<vmem>>, vector<1x128xf32>
        %49 = arith.addf %48, %32 : vector<1x128xf32>
        %c0_24 = arith.constant 0 : index
        %c0_25 = arith.constant 0 : index
        %50 = vector.load %arg20[%c0_24, %c0_25] : memref<1x256xf32, #tpu.memory_space<vmem>>, vector<1x128xf32>
        tpu.vector_store %arg20[%c0_24, %c0_25], %49 {strides = array<i32>} : memref<1x256xf32, #tpu.memory_space<vmem>>, vector<1x128xf32>,
        %c0_26 = arith.constant 0 : index
        %c0_27 = arith.constant 0 : index
        %51 = vector.load %arg21[%c0_26, %c0_27] : memref<1x256xf32, #tpu.memory_space<vmem>>, vector<1x128xf32>
        %52 = arith.addf %51, %35 : vector<1x128xf32>
        %c0_28 = arith.constant 0 : index
        %c0_29 = arith.constant 0 : index
        %53 = vector.load %arg21[%c0_28, %c0_29] : memref<1x256xf32, #tpu.memory_space<vmem>>, vector<1x128xf32>
        tpu.vector_store %arg21[%c0_28, %c0_29], %52 {strides = array<i32>} : memref<1x256xf32, #tpu.memory_space<vmem>>, vector<1x128xf32>,
      } else {
      }
      %42 = arith.truncf %30 : vector<32x128xf32> to vector<32x128xbf16>
      %43 = arith.index_cast %1 : i32 to index
      %c0_19 = arith.constant 0 : index
      %44 = vector.load %arg19[%43, %c0_19] : memref<32x128xbf16, #tpu.memory_space<vmem>>, vector<32x128xbf16>
      tpu.vector_store %arg19[%43, %c0_19], %42 {strides = array<i32>} : memref<32x128xbf16, #tpu.memory_space<vmem>>, vector<32x128xbf16>,
      %c0_i32_20 = arith.constant 0 : i32
      %45 = arith.cmpi eq, %arg1, %c0_i32_20 : i32
      %46 = arith.extui %45 : i1 to i32
      %c0_i32_21 = arith.constant 0 : i32
      %47 = arith.cmpi ne, %46, %c0_i32_21 : i32
      scf.if %47 {
        %c0_22 = arith.constant 0 : index
        %c0_23 = arith.constant 0 : index
        %48 = vector.load %arg14[%c0_22, %c0_23] : memref<1x128xf32, #tpu.memory_space<vmem>>, vector<1x128xf32>
        %c0_24 = arith.constant 0 : index
        %c0_25 = arith.constant 0 : index
        %49 = vector.load %arg15[%c0_24, %c0_25] : memref<1x128xf32, #tpu.memory_space<vmem>>, vector<1x128xf32>
        %c0_26 = arith.constant 0 : index
        %c0_27 = arith.constant 0 : index
        %50 = vector.load %arg20[%c0_26, %c0_27] : memref<1x256xf32, #tpu.memory_space<vmem>>, vector<1x128xf32>
        %cst_28 = arith.constant 1.250000e-01 : f32
        %51 = vector.broadcast %cst_28 : f32 to vector<1x128xf32>
        %52 = arith.mulf %50, %51 : vector<1x128xf32>
        %c0_29 = arith.constant 0 : index
        %c0_30 = arith.constant 0 : index
        %53 = vector.load %arg21[%c0_29, %c0_30] : memref<1x256xf32, #tpu.memory_space<vmem>>, vector<1x128xf32>
        %cst_31 = arith.constant 1.250000e-01 : f32
        %54 = vector.broadcast %cst_31 : f32 to vector<1x128xf32>
        %55 = arith.mulf %53, %54 : vector<1x128xf32>
        %56 = arith.mulf %52, %52 : vector<1x128xf32>
        %57 = arith.subf %55, %56 : vector<1x128xf32>
        %cst_32 = arith.constant 0.000000e+00 : f32
        %58 = vector.broadcast %cst_32 : f32 to vector<1x128xf32>
        %59 = arith.maximumf %57, %58 : vector<1x128xf32>
        %cst_33 = arith.constant 9.99999974E-6 : f32
        %60 = vector.broadcast %cst_33 : f32 to vector<1x128xf32>
        %61 = arith.addf %59, %60 : vector<1x128xf32>
        %62 = math.rsqrt %61 : vector<1x128xf32>
        %63 = arith.mulf %48, %62 : vector<1x128xf32>
        %cst_34 = arith.constant 1.000000e+00 : f32
        %64 = vector.broadcast %cst_34 : f32 to vector<1x128xf32>
        %65 = arith.mulf %64, %63 : vector<1x128xf32>
        %c0_35 = arith.constant 0 : index
        %c0_36 = arith.constant 0 : index
        %66 = vector.load %arg22[%c0_35, %c0_36] : memref<1x256xf32, #tpu.memory_space<vmem>>, vector<1x128xf32>
        tpu.vector_store %arg22[%c0_35, %c0_36], %65 {strides = array<i32>} : memref<1x256xf32, #tpu.memory_space<vmem>>, vector<1x128xf32>,
        %67 = arith.mulf %52, %63 : vector<1x128xf32>
        %68 = arith.subf %49, %67 : vector<1x128xf32>
        %cst_37 = arith.constant 1.000000e+00 : f32
        %69 = vector.broadcast %cst_37 : f32 to vector<1x128xf32>
        %70 = arith.mulf %69, %68 : vector<1x128xf32>
        %c0_38 = arith.constant 0 : index
        %c0_39 = arith.constant 0 : index
        %71 = vector.load %arg23[%c0_38, %c0_39] : memref<1x256xf32, #tpu.memory_space<vmem>>, vector<1x128xf32>
        tpu.vector_store %arg23[%c0_38, %c0_39], %70 {strides = array<i32>} : memref<1x256xf32, #tpu.memory_space<vmem>>, vector<1x128xf32>,
      } else {
      }
    } else {
    }
    %c3_i32 = arith.constant 3 : i32
    %11 = arith.cmpi eq, %arg0, %c3_i32 : i32
    %12 = arith.extui %11 : i1 to i32
    %c0_i32_3 = arith.constant 0 : i32
    %13 = arith.cmpi ne, %12, %c0_i32_3 : i32
    scf.if %13 {
      %14 = arith.index_cast %1 : i32 to index
      %c0 = arith.constant 0 : index
      %15 = vector.load %arg19[%14, %c0] : memref<32x128xbf16, #tpu.memory_space<vmem>>, vector<32x128xbf16>
      %16 = arith.extf %15 : vector<32x128xbf16> to vector<32x128xf32>
      %c0_4 = arith.constant 0 : index
      %c0_5 = arith.constant 0 : index
      %17 = vector.load %arg22[%c0_4, %c0_5] : memref<1x256xf32, #tpu.memory_space<vmem>>, vector<1x128xf32>
      %18 = vector.broadcast %17 : vector<1x128xf32> to vector<32x128xf32>
      %19 = arith.mulf %16, %18 : vector<32x128xf32>
      %c0_6 = arith.constant 0 : index
      %c0_7 = arith.constant 0 : index
      %20 = vector.load %arg23[%c0_6, %c0_7] : memref<1x256xf32, #tpu.memory_space<vmem>>, vector<1x128xf32>
      %21 = vector.broadcast %20 : vector<1x128xf32> to vector<32x128xf32>
      %22 = arith.addf %19, %21 : vector<32x128xf32>
      %cst = arith.constant 0.000000e+00 : f32
      %23 = vector.broadcast %cst : f32 to vector<32x128xf32>
      %24 = arith.maximumf %22, %23 : vector<32x128xf32>
      %25 = arith.truncf %24 : vector<32x128xf32> to vector<32x128xbf16>
      %c0_8 = arith.constant 0 : index
      %c0_9 = arith.constant 0 : index
      %26 = vector.load %arg8[%c0_8, %c0_9] : memref<128x128xbf16, #tpu.memory_space<vmem>>, vector<128x128xbf16>
      %cst_10 = arith.constant dense<0.000000e+00> : vector<32x128xf32>
      %27 = tpu.matmul %25, %26, %cst_10 {dimension_numbers = #tpu.dot_dimension_numbers<[1], [0], [0], [1], [0, 0, 1, 1], [], []>} : vector<32x128xbf16>, vector<128x128xbf16>, vector<32x128xf32> -> vector<32x128xf32>
      %c0_11 = arith.constant 0 : index
      %c0_12 = arith.constant 0 : index
      %28 = vector.load %arg9[%c0_11, %c0_12] : memref<1x128xf32, #tpu.memory_space<vmem>>, vector<1x128xf32>
      %29 = vector.broadcast %28 : vector<1x128xf32> to vector<32x128xf32>
      %30 = arith.addf %27, %29 : vector<32x128xf32>
      %31 = math.tanh %30 : vector<32x128xf32>
      %32 = arith.truncf %31 : vector<32x128xf32> to vector<32x128xbf16>
      %c0_13 = arith.constant 0 : index
      %c0_14 = arith.constant 0 : index
      %33 = vector.load %arg16[%c0_13, %c0_14] : memref<32x128xbf16, #tpu.memory_space<vmem>>, vector<32x128xbf16>
      tpu.vector_store %arg16[%c0_13, %c0_14], %32 {strides = array<i32>} : memref<32x128xbf16, #tpu.memory_space<vmem>>, vector<32x128xbf16>,
    } else {
    }
    return
  }
  func.func @transform_0(%arg0: i32, %arg1: i32) -> (i32, i32) {
    %c0_i32 = arith.constant 0 : i32
    %0 = arith.cmpi eq, %arg0, %c0_i32 : i32
    %c0_i32_0 = arith.constant 0 : i32
    %1 = arith.select %0, %arg1, %c0_i32_0 : i32
    %c0_i32_1 = arith.constant 0 : i32
    %c0_i32_2 = arith.constant 0 : i32
    return %1, %c0_i32_1 : i32, i32
  }
  func.func @transform_1(%arg0: i32, %arg1: i32) -> (i32, i32) {
    %c1_i32 = arith.constant 1 : i32
    %0 = arith.cmpi eq, %arg0, %c1_i32 : i32
    %c0_i32 = arith.constant 0 : i32
    %1 = arith.select %0, %arg1, %c0_i32 : i32
    %c0_i32_0 = arith.constant 0 : i32
    %c0_i32_1 = arith.constant 0 : i32
    return %1, %c0_i32_0 : i32, i32
  }
  func.func @transform_2(%arg0: i32, %arg1: i32) -> (i32, i32) {
    %c2_i32 = arith.constant 2 : i32
    %0 = arith.cmpi eq, %arg0, %c2_i32 : i32
    %c0_i32 = arith.constant 0 : i32
    %1 = arith.select %0, %arg1, %c0_i32 : i32
    %c0_i32_0 = arith.constant 0 : i32
    %c0_i32_1 = arith.constant 0 : i32
    return %1, %c0_i32_0 : i32, i32
  }
  func.func @transform_3(%arg0: i32, %arg1: i32) -> (i32, i32) {
    %c0_i32 = arith.constant 0 : i32
    %c0_i32_0 = arith.constant 0 : i32
    %c0_i32_1 = arith.constant 0 : i32
    return %c0_i32, %c0_i32_0 : i32, i32
  }
  func.func @transform_4(%arg0: i32, %arg1: i32) -> (i32, i32) {
    %c0_i32 = arith.constant 0 : i32
    %c0_i32_0 = arith.constant 0 : i32
    %c0_i32_1 = arith.constant 0 : i32
    return %c0_i32, %c0_i32_0 : i32, i32
  }
  func.func @transform_5(%arg0: i32, %arg1: i32) -> (i32, i32) {
    %c0_i32 = arith.constant 0 : i32
    %c0_i32_0 = arith.constant 0 : i32
    %c0_i32_1 = arith.constant 0 : i32
    return %c0_i32, %c0_i32_0 : i32, i32
  }
  func.func @transform_6(%arg0: i32, %arg1: i32) -> (i32, i32) {
    %c0_i32 = arith.constant 0 : i32
    %c0_i32_0 = arith.constant 0 : i32
    %c0_i32_1 = arith.constant 0 : i32
    return %c0_i32, %c0_i32_0 : i32, i32
  }
  func.func @transform_7(%arg0: i32, %arg1: i32) -> (i32, i32) {
    %c0_i32 = arith.constant 0 : i32
    %c0_i32_0 = arith.constant 0 : i32
    %c0_i32_1 = arith.constant 0 : i32
    return %c0_i32, %c0_i32_0 : i32, i32
  }
  func.func @transform_8(%arg0: i32, %arg1: i32) -> (i32, i32) {
    %c0_i32 = arith.constant 0 : i32
    %c0_i32_0 = arith.constant 0 : i32
    %c0_i32_1 = arith.constant 0 : i32
    return %c0_i32, %c0_i32_0 : i32, i32
  }
  func.func @transform_9(%arg0: i32, %arg1: i32) -> (i32, i32) {
    %c0_i32 = arith.constant 0 : i32
    %c0_i32_0 = arith.constant 0 : i32
    %c0_i32_1 = arith.constant 0 : i32
    return %c0_i32, %c0_i32_0 : i32, i32
  }
  func.func @transform_10(%arg0: i32, %arg1: i32) -> (i32, i32) {
    %c0_i32 = arith.constant 0 : i32
    %c0_i32_0 = arith.constant 0 : i32
    %c0_i32_1 = arith.constant 0 : i32
    return %c0_i32, %c0_i32_0 : i32, i32
  }
  func.func @transform_11(%arg0: i32, %arg1: i32) -> (i32, i32) {
    %c0_i32 = arith.constant 0 : i32
    %c0_i32_0 = arith.constant 0 : i32
    %c0_i32_1 = arith.constant 0 : i32
    return %c0_i32, %c0_i32_0 : i32, i32
  }
  func.func @transform_12(%arg0: i32, %arg1: i32) -> (i32, i32) {
    %c0_i32 = arith.constant 0 : i32
    %c0_i32_0 = arith.constant 0 : i32
    %c0_i32_1 = arith.constant 0 : i32
    return %c0_i32, %c0_i32_0 : i32, i32
  }
  func.func @transform_13(%arg0: i32, %arg1: i32) -> (i32, i32) {
    %c0_i32 = arith.constant 0 : i32
    %c0_i32_0 = arith.constant 0 : i32
    %c0_i32_1 = arith.constant 0 : i32
    return %c0_i32, %c0_i32_0 : i32, i32
  }
  func.func @transform_14(%arg0: i32, %arg1: i32) -> (i32, i32) {
    %c3_i32 = arith.constant 3 : i32
    %0 = arith.cmpi eq, %arg0, %c3_i32 : i32
    %c0_i32 = arith.constant 0 : i32
    %1 = arith.select %0, %arg1, %c0_i32 : i32
    %c0_i32_0 = arith.constant 0 : i32
    %c0_i32_1 = arith.constant 0 : i32
    return %1, %c0_i32_0 : i32, i32
  }
}

</mosaic_0001>

<llo_original>
// kernel: generator_forward.1
$region0: #{generator_forward.1}
  #allocation0 [shape = 'u32[]', space=smem, size = 0x4, offset = 0x4, fixed_abs, tag = 'smem constant byte address 0x4 - core index']
  #allocation1 [shape = 'u32[144,128]{1,0:T(1,128)}', space=vmem, size = 0x12000, scoped, tag = 'internal scratch']
  #allocation2 [shape = 'bf16[32,256]{1,0:T(16,128)(2,1)}', space=vmem, size = 0x4000, scoped, tag = 'scratch operand']
  #allocation3 [shape = 'bf16[32,128]{1,0:T(16,128)(2,1)}', space=vmem, size = 0x2000, scoped, tag = 'scratch operand']
  #allocation4 [shape = 'bf16[32,128]{1,0:T(16,128)(2,1)}', space=vmem, size = 0x2000, scoped, tag = 'scratch operand']
  #allocation5 [shape = 'f32[1,256]{1,0:T(1,128)}', space=vmem, size = 0x400, scoped, tag = 'scratch operand']
  #allocation6 [shape = 'f32[1,256]{1,0:T(1,128)}', space=vmem, size = 0x400, scoped, tag = 'scratch operand']
  #allocation7 [shape = 'f32[1,256]{1,0:T(1,128)}', space=vmem, size = 0x400, scoped, tag = 'scratch operand']
  #allocation8 [shape = 'f32[1,256]{1,0:T(1,128)}', space=vmem, size = 0x400, scoped, tag = 'scratch operand']
  %s0 = inlined_call_operand.vmem [shape: bf16[32,128], index: 0, kind: input, shape index: {}]
  %s1 = inlined_call_operand.vmem [shape: s8[32,256], index: 1, kind: input, shape index: {}]
  %s2 = inlined_call_operand.vmem [shape: s8[32,128], index: 2, kind: input, shape index: {}]
  %s3 = inlined_call_operand.vmem [shape: bf16[128,256], index: 3, kind: input, shape index: {}]
  %s4 = inlined_call_operand.hbm [shape: bf16[256,128], index: 4, kind: input, shape index: {}]
  %s5 = inlined_call_operand.vmem [shape: bf16[128,128], index: 5, kind: input, shape index: {}]
  %s6 = inlined_call_operand.vmem [shape: bf16[128,128], index: 6, kind: input, shape index: {}]
  %s7 = inlined_call_operand.vmem [shape: f32[1,128], index: 7, kind: input, shape index: {}]
  %s8 = inlined_call_operand.vmem [shape: f32[1,256], index: 8, kind: input, shape index: {}]
  %s9 = inlined_call_operand.vmem [shape: f32[1,256], index: 9, kind: input, shape index: {}]
  %s10 = inlined_call_operand.vmem [shape: f32[1,128], index: 10, kind: input, shape index: {}]
  %s11 = inlined_call_operand.vmem [shape: f32[1,128], index: 11, kind: input, shape index: {}]
  %s12 = inlined_call_operand.vmem [shape: f32[1,128], index: 12, kind: input, shape index: {}]
  %s13 = inlined_call_operand.vmem [shape: f32[1,128], index: 13, kind: input, shape index: {}]
  %s14 = inlined_call_operand.vmem [shape: bf16[32,128], index: 14, kind: output, shape index: {}]
  %s15 = sld [smem:[#allocation0]]
  $region145: #{generator_forward.1} parent=0
    _
  %s17 = ssub.s32 1, %s15
  %s18 = scalar_select 0, %s17, %s15
  $region1: #{generator_forward.1} parent=0
    #allocation9 [shape = 'u8[65536]{0}', space=vmem, size = 0x10000, scoped, tag = 'input window, operand 4, single buffered']
    #allocation10 [shape = 's32[2]{0}', space=sflag, size = 0x8, scoped, tag = 'scoped memory for generator_forward.1']
    %19 = vsyncpa [#allocation10], 0
    loop: start=0, step=1, limit=6
    $region2: #{generator_forward.1} parent=1 // loop_pre_header
      _
    $region3: #{generator_forward.1} parent=1 // loop_header
      %s21 = sphi 0, %s25
      %p22 = scmp.ge.s32.totalorder %s21, 6
      %s28 = sphi 0, %s40
      %s29 = sphi 0, %s36
      %s30 = sphi 0, %s28
      %s31 = sphi 0, %s29
      %s32 = sphi 0, %s30
      %s33 = sphi 0, %s31
      %s47 = sphi 0, %s49
      %s50 = sphi 0, %s47
      %s51 = sphi 0, %s50
      %s67 = sphi 0, %s51
      %s77 = sphi 0, %s79
      %s80 = sphi 0, %s77
      %s81 = sphi 0, %s80
      %s97 = sphi 0, %s81
      %s107 = sphi 0, %s109
      %s110 = sphi 0, %s107
      %s111 = sphi 0, %s110
      %s127 = sphi 0, %s111
      %s131 = sphi 0, %s131
      %s133 = sphi 0, %s131
      %s134 = sphi 0, %s133
      %s148 = sphi 0, %s134
      %s152 = sphi 0, %s152
      %s154 = sphi 0, %s152
      %s155 = sphi 0, %s154
      %s169 = sphi 0, %s155
      %s173 = sphi 0, %s173
      %s175 = sphi 0, %s173
      %s176 = sphi 0, %s175
      %s190 = sphi 0, %s176
      %s194 = sphi 0, %s194
      %s196 = sphi 0, %s194
      %s197 = sphi 0, %s196
      %s211 = sphi 0, %s197
      %s215 = sphi 0, %s215
      %s217 = sphi 0, %s215
      %s218 = sphi 0, %s217
      %s232 = sphi 0, %s218
      %s236 = sphi 0, %s236
      %s238 = sphi 0, %s236
      %s239 = sphi 0, %s238
      %s253 = sphi 0, %s239
      %s257 = sphi 0, %s257
      %s259 = sphi 0, %s257
      %s260 = sphi 0, %s259
      %s274 = sphi 0, %s260
      %s278 = sphi 0, %s278
      %s280 = sphi 0, %s278
      %s281 = sphi 0, %s280
      %s295 = sphi 0, %s281
      %s299 = sphi 0, %s299
      %s301 = sphi 0, %s299
      %s302 = sphi 0, %s301
      %s316 = sphi 0, %s302
      %s320 = sphi 0, %s320
      %s322 = sphi 0, %s320
      %s323 = sphi 0, %s322
      %s337 = sphi 0, %s323
      %s341 = sphi 0, %s341
      %s343 = sphi 0, %s341
      %s344 = sphi 0, %s343
      %s358 = sphi 0, %s344
      %s368 = sphi 0, %s370
      %s371 = sphi 0, %s368
      %s372 = sphi 0, %s371
      %s388 = sphi 0, %s372
    $region4: #{generator_forward.1} parent=1 // loop_header_branch
      %24 = sbr.rel (%p22) target = $region8
    $region5: #{generator_forward.1} parent=1 // loop_body
      %s26 = ssub.s32 %s21, 1
      %s27 = ssub.s32 %s21, 2
      %s34 = sadd.s32 1, %s29
      %p35 = scmp.ge.s32.totalorder %s34, 1
      %s36 = scalar_select %p35, 0, %s34
      %s37 = sadd.s32 1, %s28
      %s38 = scalar_select %p35, %s37, %s28
      %p39 = scmp.ge.s32.totalorder %s38, 4
      %s40 = scalar_select %p39, 0, %s38
      %p41 = scmp.eq.s32.totalorder %s28, 0
      %s42 = scalar_select %p41, %s29, 0
      %p43 = scmp.eq.s32.totalorder %s40, 0
      %s44 = scalar_select %p43, %s36, 0
      %s45 = ssub.s32 %s42, %s44
      %p46 = scmp.eq.s32.totalorder %s45, 0
      %s48 = sadd.s32 %s47, 1
      %s49 = scalar_select %p46, %s47, %s48
      %p52 = pneg %p46
      %p53 = scmp.eq.s32.totalorder %s21, 3
      %p54 = por %p52, %p53
      %p55 = scmp.ne.s32.totalorder %s47, %s50
      %p56 = scmp.eq.s32.totalorder %s21, 0
      %p57 = por %p55, %p56
      %p58 = scmp.ne.s32.totalorder %s47, %s50
      %p59 = scmp.eq.s32.totalorder %s26, 3
      %p60 = por %p58, %p59
      %p61 = scmp.ne.s32.totalorder %s50, %s51
      %p62 = scmp.eq.s32.totalorder %s26, 0
      %p63 = por %p61, %p62
      %p64 = scmp.ne.s32.totalorder %s50, %s51
      %p65 = scmp.eq.s32.totalorder %s27, 3
      %p66 = por %p64, %p65
      %p68 = scmp.ne.s32.totalorder %s51, %s67
      %p69 = scmp.eq.s32.totalorder %s27, 0
      %p70 = por %p68, %p69
      %p71 = scmp.eq.s32.totalorder %s28, 1
      %s72 = scalar_select %p71, %s29, 0
      %p73 = scmp.eq.s32.totalorder %s40, 1
      %s74 = scalar_select %p73, %s36, 0
      %s75 = ssub.s32 %s72, %s74
      %p76 = scmp.eq.s32.totalorder %s75, 0
      %s78 = sadd.s32 %s77, 1
      %s79 = scalar_select %p76, %s77, %s78
      %p82 = pneg %p76
      %p83 = scmp.eq.s32.totalorder %s21, 3
      %p84 = por %p82, %p83
      %p85 = scmp.ne.s32.totalorder %s77, %s80
      %p86 = scmp.eq.s32.totalorder %s21, 0
      %p87 = por %p85, %p86
      %p88 = scmp.ne.s32.totalorder %s77, %s80
      %p89 = scmp.eq.s32.totalorder %s26, 3
      %p90 = por %p88, %p89
      %p91 = scmp.ne.s32.totalorder %s80, %s81
      %p92 = scmp.eq.s32.totalorder %s26, 0
      %p93 = por %p91, %p92
      %p94 = scmp.ne.s32.totalorder %s80, %s81
      %p95 = scmp.eq.s32.totalorder %s27, 3
      %p96 = por %p94, %p95
      %p98 = scmp.ne.s32.totalorder %s81, %s97
      %p99 = scmp.eq.s32.totalorder %s27, 0
      %p100 = por %p98, %p99
      %p101 = scmp.eq.s32.totalorder %s28, 2
      %s102 = scalar_select %p101, %s29, 0
      %p103 = scmp.eq.s32.totalorder %s40, 2
      %s104 = scalar_select %p103, %s36, 0
      %s105 = ssub.s32 %s102, %s104
      %p106 = scmp.eq.s32.totalorder %s105, 0
      %s108 = sadd.s32 %s107, 1
      %s109 = scalar_select %p106, %s107, %s108
      %p112 = pneg %p106
      %p113 = scmp.eq.s32.totalorder %s21, 3
      %p114 = por %p112, %p113
      %p115 = scmp.ne.s32.totalorder %s107, %s110
      %p116 = scmp.eq.s32.totalorder %s21, 0
      %p117 = por %p115, %p116
      %p118 = scmp.ne.s32.totalorder %s107, %s110
      %p119 = scmp.eq.s32.totalorder %s26, 3
      %p120 = por %p118, %p119
      %p121 = scmp.ne.s32.totalorder %s110, %s111
      %p122 = scmp.eq.s32.totalorder %s26, 0
      %p123 = por %p121, %p122
      %p124 = scmp.ne.s32.totalorder %s110, %s111
      %p125 = scmp.eq.s32.totalorder %s27, 3
      %p126 = por %p124, %p125
      %p128 = scmp.ne.s32.totalorder %s111, %s127
      %p129 = scmp.eq.s32.totalorder %s27, 0
      %p130 = por %p128, %p129
      %s132 = sadd.s32 %s131, 1
      %p135 = scmp.eq.s32.totalorder %s21, 3
      %p136 = scmp.ne.s32.totalorder %s131, %s133
      %p137 = scmp.eq.s32.totalorder %s21, 0
      %p138 = por %p136, %p137
      %p139 = scmp.ne.s32.totalorder %s131, %s133
      %p140 = scmp.eq.s32.totalorder %s26, 3
      %p141 = por %p139, %p140
      %p142 = scmp.ne.s32.totalorder %s133, %s134
      %p143 = scmp.eq.s32.totalorder %s26, 0
      %p144 = por %p142, %p143
      %p145 = scmp.ne.s32.totalorder %s133, %s134
      %p146 = scmp.eq.s32.totalorder %s27, 3
      %p147 = por %p145, %p146
      %p149 = scmp.ne.s32.totalorder %s134, %s148
      %p150 = scmp.eq.s32.totalorder %s27, 0
      %p151 = por %p149, %p150
      %s153 = sadd.s32 %s152, 1
      %p156 = scmp.eq.s32.totalorder %s21, 3
      %p157 = scmp.ne.s32.totalorder %s152, %s154
      %p158 = scmp.eq.s32.totalorder %s21, 0
      %p159 = por %p157, %p158
      %p160 = scmp.ne.s32.totalorder %s152, %s154
      %p161 = scmp.eq.s32.totalorder %s26, 3
      %p162 = por %p160, %p161
      %p163 = scmp.ne.s32.totalorder %s154, %s155
      %p164 = scmp.eq.s32.totalorder %s26, 0
      %p165 = por %p163, %p164
      %p166 = scmp.ne.s32.totalorder %s154, %s155
      %p167 = scmp.eq.s32.totalorder %s27, 3
      %p168 = por %p166, %p167
      %p170 = scmp.ne.s32.totalorder %s155, %s169
      %p171 = scmp.eq.s32.totalorder %s27, 0
      %p172 = por %p170, %p171
      %s174 = sadd.s32 %s173, 1
      %p177 = scmp.eq.s32.totalorder %s21, 3
      %p178 = scmp.ne.s32.totalorder %s173, %s175
      %p179 = scmp.eq.s32.totalorder %s21, 0
      %p180 = por %p178, %p179
      %p181 = scmp.ne.s32.totalorder %s173, %s175
      %p182 = scmp.eq.s32.totalorder %s26, 3
      %p183 = por %p181, %p182
      %p184 = scmp.ne.s32.totalorder %s175, %s176
      %p185 = scmp.eq.s32.totalorder %s26, 0
      %p186 = por %p184, %p185
      %p187 = scmp.ne.s32.totalorder %s175, %s176
      %p188 = scmp.eq.s32.totalorder %s27, 3
      %p189 = por %p187, %p188
      %p191 = scmp.ne.s32.totalorder %s176, %s190
      %p192 = scmp.eq.s32.totalorder %s27, 0
      %p193 = por %p191, %p192
      %s195 = sadd.s32 %s194, 1
      %p198 = scmp.eq.s32.totalorder %s21, 3
      %p199 = scmp.ne.s32.totalorder %s194, %s196
      %p200 = scmp.eq.s32.totalorder %s21, 0
      %p201 = por %p199, %p200
      %p202 = scmp.ne.s32.totalorder %s194, %s196
      %p203 = scmp.eq.s32.totalorder %s26, 3
      %p204 = por %p202, %p203
      %p205 = scmp.ne.s32.totalorder %s196, %s197
      %p206 = scmp.eq.s32.totalorder %s26, 0
      %p207 = por %p205, %p206
      %p208 = scmp.ne.s32.totalorder %s196, %s197
      %p209 = scmp.eq.s32.totalorder %s27, 3
      %p210 = por %p208, %p209
      %p212 = scmp.ne.s32.totalorder %s197, %s211
      %p213 = scmp.eq.s32.totalorder %s27, 0
      %p214 = por %p212, %p213
      %s216 = sadd.s32 %s215, 1
      %p219 = scmp.eq.s32.totalorder %s21, 3
      %p220 = scmp.ne.s32.totalorder %s215, %s217
      %p221 = scmp.eq.s32.totalorder %s21, 0
      %p222 = por %p220, %p221
      %p223 = scmp.ne.s32.totalorder %s215, %s217
      %p224 = scmp.eq.s32.totalorder %s26, 3
      %p225 = por %p223, %p224
      %p226 = scmp.ne.s32.totalorder %s217, %s218
      %p227 = scmp.eq.s32.totalorder %s26, 0
      %p228 = por %p226, %p227
      %p229 = scmp.ne.s32.totalorder %s217, %s218
      %p230 = scmp.eq.s32.totalorder %s27, 3
      %p231 = por %p229, %p230
      %p233 = scmp.ne.s32.totalorder %s218, %s232
      %p234 = scmp.eq.s32.totalorder %s27, 0
      %p235 = por %p233, %p234
      %s237 = sadd.s32 %s236, 1
      %p240 = scmp.eq.s32.totalorder %s21, 3
      %p241 = scmp.ne.s32.totalorder %s236, %s238
      %p242 = scmp.eq.s32.totalorder %s21, 0
      %p243 = por %p241, %p242
      %p244 = scmp.ne.s32.totalorder %s236, %s238
      %p245 = scmp.eq.s32.totalorder %s26, 3
      %p246 = por %p244, %p245
      %p247 = scmp.ne.s32.totalorder %s238, %s239
      %p248 = scmp.eq.s32.totalorder %s26, 0
      %p249 = por %p247, %p248
      %p250 = scmp.ne.s32.totalorder %s238, %s239
      %p251 = scmp.eq.s32.totalorder %s27, 3
      %p252 = por %p250, %p251
      %p254 = scmp.ne.s32.totalorder %s239, %s253
      %p255 = scmp.eq.s32.totalorder %s27, 0
      %p256 = por %p254, %p255
      %s258 = sadd.s32 %s257, 1
      %p261 = scmp.eq.s32.totalorder %s21, 3
      %p262 = scmp.ne.s32.totalorder %s257, %s259
      %p263 = scmp.eq.s32.totalorder %s21, 0
      %p264 = por %p262, %p263
      %p265 = scmp.ne.s32.totalorder %s257, %s259
      %p266 = scmp.eq.s32.totalorder %s26, 3
      %p267 = por %p265, %p266
      %p268 = scmp.ne.s32.totalorder %s259, %s260
      %p269 = scmp.eq.s32.totalorder %s26, 0
      %p270 = por %p268, %p269
      %p271 = scmp.ne.s32.totalorder %s259, %s260
      %p272 = scmp.eq.s32.totalorder %s27, 3
      %p273 = por %p271, %p272
      %p275 = scmp.ne.s32.totalorder %s260, %s274
      %p276 = scmp.eq.s32.totalorder %s27, 0
      %p277 = por %p275, %p276
      %s279 = sadd.s32 %s278, 1
      %p282 = scmp.eq.s32.totalorder %s21, 3
      %p283 = scmp.ne.s32.totalorder %s278, %s280
      %p284 = scmp.eq.s32.totalorder %s21, 0
      %p285 = por %p283, %p284
      %p286 = scmp.ne.s32.totalorder %s278, %s280
      %p287 = scmp.eq.s32.totalorder %s26, 3
      %p288 = por %p286, %p287
      %p289 = scmp.ne.s32.totalorder %s280, %s281
      %p290 = scmp.eq.s32.totalorder %s26, 0
      %p291 = por %p289, %p290
      %p292 = scmp.ne.s32.totalorder %s280, %s281
      %p293 = scmp.eq.s32.totalorder %s27, 3
      %p294 = por %p292, %p293
      %p296 = scmp.ne.s32.totalorder %s281, %s295
      %p297 = scmp.eq.s32.totalorder %s27, 0
      %p298 = por %p296, %p297
      %s300 = sadd.s32 %s299, 1
      %p303 = scmp.eq.s32.totalorder %s21, 3
      %p304 = scmp.ne.s32.totalorder %s299, %s301
      %p305 = scmp.eq.s32.totalorder %s21, 0
      %p306 = por %p304, %p305
      %p307 = scmp.ne.s32.totalorder %s299, %s301
      %p308 = scmp.eq.s32.totalorder %s26, 3
      %p309 = por %p307, %p308
      %p310 = scmp.ne.s32.totalorder %s301, %s302
      %p311 = scmp.eq.s32.totalorder %s26, 0
      %p312 = por %p310, %p311
      %p313 = scmp.ne.s32.totalorder %s301, %s302
      %p314 = scmp.eq.s32.totalorder %s27, 3
      %p315 = por %p313, %p314
      %p317 = scmp.ne.s32.totalorder %s302, %s316
      %p318 = scmp.eq.s32.totalorder %s27, 0
      %p319 = por %p317, %p318
      %s321 = sadd.s32 %s320, 1
      %p324 = scmp.eq.s32.totalorder %s21, 3
      %p325 = scmp.ne.s32.totalorder %s320, %s322
      %p326 = scmp.eq.s32.totalorder %s21, 0
      %p327 = por %p325, %p326
      %p328 = scmp.ne.s32.totalorder %s320, %s322
      %p329 = scmp.eq.s32.totalorder %s26, 3
      %p330 = por %p328, %p329
      %p331 = scmp.ne.s32.totalorder %s322, %s323
      %p332 = scmp.eq.s32.totalorder %s26, 0
      %p333 = por %p331, %p332
      %p334 = scmp.ne.s32.totalorder %s322, %s323
      %p335 = scmp.eq.s32.totalorder %s27, 3
      %p336 = por %p334, %p335
      %p338 = scmp.ne.s32.totalorder %s323, %s337
      %p339 = scmp.eq.s32.totalorder %s27, 0
      %p340 = por %p338, %p339
      %s342 = sadd.s32 %s341, 1
      %p345 = scmp.eq.s32.totalorder %s21, 3
      %p346 = scmp.ne.s32.totalorder %s341, %s343
      %p347 = scmp.eq.s32.totalorder %s21, 0
      %p348 = por %p346, %p347
      %p349 = scmp.ne.s32.totalorder %s341, %s343
      %p350 = scmp.eq.s32.totalorder %s26, 3
      %p351 = por %p349, %p350
      %p352 = scmp.ne.s32.totalorder %s343, %s344
      %p353 = scmp.eq.s32.totalorder %s26, 0
      %p354 = por %p352, %p353
      %p355 = scmp.ne.s32.totalorder %s343, %s344
      %p356 = scmp.eq.s32.totalorder %s27, 3
      %p357 = por %p355, %p356
      %p359 = scmp.ne.s32.totalorder %s344, %s358
      %p360 = scmp.eq.s32.totalorder %s27, 0
      %p361 = por %p359, %p360
      %p362 = scmp.eq.s32.totalorder %s28, 3
      %s363 = scalar_select %p362, %s29, 0
      %p364 = scmp.eq.s32.totalorder %s40, 3
      %s365 = scalar_select %p364, %s36, 0
      %s366 = ssub.s32 %s363, %s365
      %p367 = scmp.eq.s32.totalorder %s366, 0
      %s369 = sadd.s32 %s368, 1
      %s370 = scalar_select %p367, %s368, %s369
      %p373 = pneg %p367
      %p374 = scmp.eq.s32.totalorder %s21, 3
      %p375 = por %p373, %p374
      %p376 = scmp.ne.s32.totalorder %s368, %s371
      %p377 = scmp.eq.s32.totalorder %s21, 0
      %p378 = por %p376, %p377
      %p379 = scmp.ne.s32.totalorder %s368, %s371
      %p380 = scmp.eq.s32.totalorder %s26, 3
      %p381 = por %p379, %p380
      %p382 = scmp.ne.s32.totalorder %s371, %s372
      %p383 = scmp.eq.s32.totalorder %s26, 0
      %p384 = por %p382, %p383
      %p385 = scmp.ne.s32.totalorder %s371, %s372
      %p386 = scmp.eq.s32.totalorder %s27, 3
      %p387 = por %p385, %p386
      %p389 = scmp.ne.s32.totalorder %s372, %s388
      %p390 = scmp.eq.s32.totalorder %s27, 0
      %p391 = por %p389, %p390
      %p392 = scmp.le.s32.totalorder 1, %s21
      %p393 = scmp.lt.s32.totalorder %s21, 5
      %p394 = pnand %p392, %p393
      %p395 = pneg %p394
      // Predicated region
      $region9: #{generator_forward.1} parent=5 // pred_check
        _
      $region10: #{generator_forward.1} parent=5 // pred_check_branch
        %397 = sbr.rel (%p394) target = $region12
      $region11: #{generator_forward.1} parent=5 // pred_region
        %s398 = ssub.s32 %s21, 1
        // Predicated region
        $region13: #{generator_forward.1} parent=11 // pred_check
          %p399 = pneg %p144
        $region14: #{generator_forward.1} parent=11 // pred_check_branch
          %401 = sbr.rel (%p399) target = $region16
        $region15: #{generator_forward.1} parent=11 // pred_region
          _
        $region16: #{generator_forward.1} parent=11 // pred_fallthru
          _
        // Predicated region
        $region17: #{generator_forward.1} parent=11 // pred_check
          %p402 = pneg %p165
        $region18: #{generator_forward.1} parent=11 // pred_check_branch
          %404 = sbr.rel (%p402) target = $region20
        $region19: #{generator_forward.1} parent=11 // pred_region
          %s406 = ssub.s32 2048, 2048
          %407 = vsyncadd [#allocation10], %s406
          %s408 = sshll.u32 [#allocation9], 4
          %s409 = int_to_ptr.vmem [resolvable:$true] %s408
          %414 = dma.hbm_to_vmem [thread:$0]  %s4, 2048, %s409, [#allocation10], 64, 64, 4
        $region20: #{generator_forward.1} parent=11 // pred_fallthru
          _
        // Predicated region
        $region21: #{generator_forward.1} parent=11 // pred_check
          %p415 = pneg %p186
        $region22: #{generator_forward.1} parent=11 // pred_check_branch
          %417 = sbr.rel (%p415) target = $region24
        $region23: #{generator_forward.1} parent=11 // pred_region
          _
        $region24: #{generator_forward.1} parent=11 // pred_fallthru
          _
        // Predicated region
        $region25: #{generator_forward.1} parent=11 // pred_check
          %p418 = pneg %p207
        $region26: #{generator_forward.1} parent=11 // pred_check_branch
          %420 = sbr.rel (%p418) target = $region28
        $region27: #{generator_forward.1} parent=11 // pred_region
          _
        $region28: #{generator_forward.1} parent=11 // pred_fallthru
          _
        // Predicated region
        $region29: #{generator_forward.1} parent=11 // pred_check
          %p421 = pneg %p228
        $region30: #{generator_forward.1} parent=11 // pred_check_branch
          %423 = sbr.rel (%p421) target = $region32
        $region31: #{generator_forward.1} parent=11 // pred_region
          _
        $region32: #{generator_forward.1} parent=11 // pred_fallthru
          _
        // Predicated region
        $region33: #{generator_forward.1} parent=11 // pred_check
          %p424 = pneg %p249
        $region34: #{generator_forward.1} parent=11 // pred_check_branch
          %426 = sbr.rel (%p424) target = $region36
        $region35: #{generator_forward.1} parent=11 // pred_region
          _
        $region36: #{generator_forward.1} parent=11 // pred_fallthru
          _
        // Predicated region
        $region37: #{generator_forward.1} parent=11 // pred_check
          %p427 = pneg %p270
        $region38: #{generator_forward.1} parent=11 // pred_check_branch
          %429 = sbr.rel (%p427) target = $region40
        $region39: #{generator_forward.1} parent=11 // pred_region
          _
        $region40: #{generator_forward.1} parent=11 // pred_fallthru
          _
        // Predicated region
        $region41: #{generator_forward.1} parent=11 // pred_check
          %p430 = pneg %p291
        $region42: #{generator_forward.1} parent=11 // pred_check_branch
          %432 = sbr.rel (%p430) target = $region44
        $region43: #{generator_forward.1} parent=11 // pred_region
          _
        $region44: #{generator_forward.1} parent=11 // pred_fallthru
          _
        // Predicated region
        $region45: #{generator_forward.1} parent=11 // pred_check
          %p433 = pneg %p312
        $region46: #{generator_forward.1} parent=11 // pred_check_branch
          %435 = sbr.rel (%p433) target = $region48
        $region47: #{generator_forward.1} parent=11 // pred_region
          _
        $region48: #{generator_forward.1} parent=11 // pred_fallthru
          _
        // Predicated region
        $region49: #{generator_forward.1} parent=11 // pred_check
          %p436 = pneg %p333
        $region50: #{generator_forward.1} parent=11 // pred_check_branch
          %438 = sbr.rel (%p436) target = $region52
        $region51: #{generator_forward.1} parent=11 // pred_region
          _
        $region52: #{generator_forward.1} parent=11 // pred_fallthru
          _
        // Predicated region
        $region53: #{generator_forward.1} parent=11 // pred_check
          %p439 = pneg %p354
        $region54: #{generator_forward.1} parent=11 // pred_check_branch
          %441 = sbr.rel (%p439) target = $region56
        $region55: #{generator_forward.1} parent=11 // pred_region
          _
        $region56: #{generator_forward.1} parent=11 // pred_fallthru
          _
      $region12: #{generator_forward.1} parent=5 // pred_fallthru
        _
      %p442 = scmp.lt.s32.totalorder %s21, 4
      // Predicated region
      $region57: #{generator_forward.1} parent=5 // pred_check
        %p443 = pneg %p442
      $region58: #{generator_forward.1} parent=5 // pred_check_branch
        %445 = sbr.rel (%p443) target = $region60
      $region59: #{generator_forward.1} parent=5 // pred_region
        // Predicated region
        $region61: #{generator_forward.1} parent=59 // pred_check
          %p446 = pneg %p57
        $region62: #{generator_forward.1} parent=59 // pred_check_branch
          %448 = sbr.rel (%p446) target = $region64
        $region63: #{generator_forward.1} parent=59 // pred_region
          %p449 = scmp.eq.s32.totalorder %s28, 0
          %s450 = scalar_select %p449, %s29, 0
          %s451 = smul.u32 4, %s450
          %p452 = scmp.lt.s32.totalorder %s451, 3
          %s453 = scalar_select %p452, %s451, 3
          %s454 = smul.addr %s453, 4
          %s455 = scalar_lea.vmem %s0, %s454
          %p456 = scmp.eq.s32.totalorder %s28, 0
          %s457 = scalar_select %p456, %s29, 0
          %s458 = smul.u32 4, %s457
        $region64: #{generator_forward.1} parent=59 // pred_fallthru
          _
        // Predicated region
        $region65: #{generator_forward.1} parent=59 // pred_check
          %p459 = pneg %p87
        $region66: #{generator_forward.1} parent=59 // pred_check_branch
          %461 = sbr.rel (%p459) target = $region68
        $region67: #{generator_forward.1} parent=59 // pred_region
          %p462 = scmp.eq.s32.totalorder %s28, 1
          %s463 = scalar_select %p462, %s29, 0
          %p464 = scmp.lt.s32.totalorder %s463, 0
          %s465 = scalar_select %p464, %s463, 0
          %s466 = smul.addr %s465, 2
          %s467 = smul.addr %s466, 8
          %s468 = scalar_lea.vmem %s1, %s467
          %p469 = scmp.eq.s32.totalorder %s28, 1
          %s470 = scalar_select %p469, %s29, 0
        $region68: #{generator_forward.1} parent=59 // pred_fallthru
          _
        // Predicated region
        $region69: #{generator_forward.1} parent=59 // pred_check
          %p471 = pneg %p117
        $region70: #{generator_forward.1} parent=59 // pred_check_branch
          %473 = sbr.rel (%p471) target = $region72
        $region71: #{generator_forward.1} parent=59 // pred_region
          %p474 = scmp.eq.s32.totalorder %s28, 2
          %s475 = scalar_select %p474, %s29, 0
          %p476 = scmp.lt.s32.totalorder %s475, 0
          %s477 = scalar_select %p476, %s475, 0
          %s478 = smul.addr %s477, 8
          %s479 = scalar_lea.vmem %s2, %s478
          %p480 = scmp.eq.s32.totalorder %s28, 2
          %s481 = scalar_select %p480, %s29, 0
        $region72: #{generator_forward.1} parent=59 // pred_fallthru
          _
      $region60: #{generator_forward.1} parent=5 // pred_fallthru
        _
      %p482 = scmp.le.s32.totalorder 1, %s21
      %p483 = scmp.lt.s32.totalorder %s21, 5
      %p484 = pnand %p482, %p483
      %p485 = pneg %p484
      // Predicated region
      $region73: #{generator_forward.1} parent=5 // pred_check
        _
      $region74: #{generator_forward.1} parent=5 // pred_check_branch
        %487 = sbr.rel (%p484) target = $region76
      $region75: #{generator_forward.1} parent=5 // pred_region
        %s488 = ssub.s32 %s21, 1
        // Predicated region
        $region77: #{generator_forward.1} parent=75 // pred_check
          %p489 = pneg %p165
        $region78: #{generator_forward.1} parent=75 // pred_check_branch
          %491 = sbr.rel (%p489) target = $region80
        $region79: #{generator_forward.1} parent=75 // pred_region
          %492 = dma.done [#allocation10], 2048
        $region80: #{generator_forward.1} parent=75 // pred_fallthru
          _
        %p493 = scmp.eq.s32.totalorder %s30, 0
        %s494 = scalar_select %p493, %s31, 0
        %s495 = smul.u32 4, %s494
        %p496 = scmp.lt.s32.totalorder %s495, 3
        %s497 = scalar_select %p496, %s495, 3
        %s498 = smul.addr %s497, 4
        %s499 = scalar_lea.vmem %s0, %s498
        %p500 = pneg %p63
        %p501 = pneg %p60
        %p502 = scmp.eq.s32.totalorder %s30, 1
        %s503 = scalar_select %p502, %s31, 0
        %p504 = scmp.lt.s32.totalorder %s503, 0
        %s505 = scalar_select %p504, %s503, 0
        %s506 = smul.addr %s505, 2
        %s507 = smul.addr %s506, 8
        %s508 = scalar_lea.vmem %s1, %s507
        %p509 = pneg %p93
        %p510 = pneg %p90
        %p511 = scmp.eq.s32.totalorder %s30, 2
        %s512 = scalar_select %p511, %s31, 0
        %p513 = scmp.lt.s32.totalorder %s512, 0
        %s514 = scalar_select %p513, %s512, 0
        %s515 = smul.addr %s514, 8
        %s516 = scalar_lea.vmem %s2, %s515
        %p517 = pneg %p123
        %p518 = pneg %p120
        %p519 = pneg %p144
        %p520 = pneg %p141
        %p521 = pneg %p165
        %p522 = pneg %p162
        %p523 = pneg %p186
        %p524 = pneg %p183
        %p525 = pneg %p207
        %p526 = pneg %p204
        %p527 = pneg %p228
        %p528 = pneg %p225
        %p529 = pneg %p249
        %p530 = pneg %p246
        %p531 = pneg %p270
        %p532 = pneg %p267
        %p533 = pneg %p291
        %p534 = pneg %p288
        %p535 = pneg %p312
        %p536 = pneg %p309
        %p537 = pneg %p333
        %p538 = pneg %p330
        %p539 = pneg %p354
        %p540 = pneg %p351
        %p541 = pneg %p384
        %p542 = pneg %p381
        %p543 = scmp.eq.s32.totalorder %s30, 3
        %s544 = scalar_select %p543, %s31, 0
        %s545 = smul.u32 4, %s544
        %p546 = scmp.lt.s32.totalorder %s545, 3
        %s547 = scalar_select %p546, %s545, 3
        %s548 = smul.addr %s547, 4
        %s549 = scalar_lea.vmem %s14, %s548
        %p550 = scmp.eq.s32.totalorder %s30, 0
        %s551 = scalar_select %p550, %s31, 0
        %s552 = smul.u32 4, %s551
        %p553 = scmp.lt.s32.totalorder %s552, 3
        %s554 = scalar_select %p553, %s552, 3
        %s555 = smul.addr %s554, 4
        %s556 = scalar_lea.vmem %s0, %s555
        %p557 = scmp.eq.s32.totalorder %s30, 0
        %s558 = scalar_select %p557, %s31, 0
        %s559 = smul.u32 4, %s558
        %p560 = scmp.eq.s32.totalorder %s30, 1
        %s561 = scalar_select %p560, %s31, 0
        %p562 = scmp.lt.s32.totalorder %s561, 0
        %s563 = scalar_select %p562, %s561, 0
        %s564 = smul.addr %s563, 2
        %s565 = smul.addr %s564, 8
        %s566 = scalar_lea.vmem %s1, %s565
        %p567 = scmp.eq.s32.totalorder %s30, 1
        %s568 = scalar_select %p567, %s31, 0
        %p569 = scmp.eq.s32.totalorder %s30, 2
        %s570 = scalar_select %p569, %s31, 0
        %p571 = scmp.lt.s32.totalorder %s570, 0
        %s572 = scalar_select %p571, %s570, 0
        %s573 = smul.addr %s572, 8
        %s574 = scalar_lea.vmem %s2, %s573
        %p575 = scmp.eq.s32.totalorder %s30, 2
        %s576 = scalar_select %p575, %s31, 0
        %p577 = scmp.eq.s32.totalorder %s30, 3
        %s578 = scalar_select %p577, %s31, 0
        %s579 = smul.u32 4, %s578
        %p580 = scmp.lt.s32.totalorder %s579, 3
        %s581 = scalar_select %p580, %s579, 3
        %s582 = smul.addr %s581, 4
        %s583 = scalar_lea.vmem %s14, %s582
        %p584 = scmp.eq.s32.totalorder %s30, 3
        %s585 = scalar_select %p584, %s31, 0
        %s586 = smul.u32 4, %s585
        %s588 = smul.u32 %s31, 32
        %p589 = scmp.eq.s32.totalorder %s30, 0
        // Predicated region
        $region81: #{generator_forward.1} parent=75 // pred_check
          %p590 = pneg %p589
        $region82: #{generator_forward.1} parent=75 // pred_check_branch
          %592 = sbr.rel (%p590) target = $region84
        $region83: #{generator_forward.1} parent=75 // pred_region
          %v593 = vld [vmem:[%s556] sm:$0xf]
          %v594 = vld [vmem:[%s556 + $0x4] sm:$0xf]
          %v595 = vld [vmem:[%s556 + $0x8] sm:$0xf]
          %v596 = vld [vmem:[%s556 + $0xc] sm:$0xf]
          %v597 = vld [vmem:[%s3] sm:$0xff]
          %v598 = vld [vmem:[%s3 + $0x8] sm:$0xff]
          %v599 = vld [vmem:[%s3 + $0x10] sm:$0xff]
          %v600 = vld [vmem:[%s3 + $0x18] sm:$0xff]
          %v601 = vld [vmem:[%s3 + $0x20] sm:$0xff]
          %v602 = vld [vmem:[%s3 + $0x28] sm:$0xff]
          %v603 = vld [vmem:[%s3 + $0x30] sm:$0xff]
          %v604 = vld [vmem:[%s3 + $0x38] sm:$0xff]
          %v605 = vld [vmem:[%s3 + $0x40] sm:$0xff]
          %v606 = vld [vmem:[%s3 + $0x48] sm:$0xff]
          %v607 = vld [vmem:[%s3 + $0x50] sm:$0xff]
          %v608 = vld [vmem:[%s3 + $0x58] sm:$0xff]
          %v609 = vld [vmem:[%s3 + $0x60] sm:$0xff]
          %v610 = vld [vmem:[%s3 + $0x68] sm:$0xff]
          %v611 = vld [vmem:[%s3 + $0x70] sm:$0xff]
          %v612 = vld [vmem:[%s3 + $0x78] sm:$0xff]
          %v617 = vunpack.c.l.b16 %v593
          %v618 = vunpack.c.l.b16 %v594
          %v619 = vunpack.c.l.b16 %v595
          %v620 = vunpack.c.l.b16 %v596
          %v621 = vpack.c.b16 %v618, %v617
          %v622 = vpack.c.b16 %v620, %v619
          %v641 = vunpack.c.l.b16 %v597
          %v642 = vunpack.c.h.b16 %v597
          %v643 = vunpack.c.l.b16 %v598
          %v644 = vunpack.c.h.b16 %v598
          %v645 = vunpack.c.l.b16 %v599
          %v646 = vunpack.c.h.b16 %v599
          %v647 = vunpack.c.l.b16 %v600
          %v648 = vunpack.c.h.b16 %v600
          %v649 = vunpack.c.l.b16 %v601
          %v650 = vunpack.c.h.b16 %v601
          %v651 = vunpack.c.l.b16 %v602
          %v652 = vunpack.c.h.b16 %v602
          %v653 = vunpack.c.l.b16 %v603
          %v654 = vunpack.c.h.b16 %v603
          %v655 = vunpack.c.l.b16 %v604
          %v656 = vunpack.c.h.b16 %v604
          %v657 = vunpack.c.l.b16 %v605
          %v658 = vunpack.c.h.b16 %v605
          %v659 = vunpack.c.l.b16 %v606
          %v660 = vunpack.c.h.b16 %v606
          %v661 = vunpack.c.l.b16 %v607
          %v662 = vunpack.c.h.b16 %v607
          %v663 = vunpack.c.l.b16 %v608
          %v664 = vunpack.c.h.b16 %v608
          %v665 = vunpack.c.l.b16 %v609
          %v666 = vunpack.c.h.b16 %v609
          %v667 = vunpack.c.l.b16 %v610
          %v668 = vunpack.c.h.b16 %v610
          %v669 = vunpack.c.l.b16 %v611
          %v670 = vunpack.c.h.b16 %v611
          %v671 = vunpack.c.l.b16 %v612
          %v672 = vunpack.c.h.b16 %v612
          %v673 = vpack.c.b16 %v643, %v641
          %v674 = vpack.c.b16 %v644, %v642
          %v675 = vpack.c.b16 %v647, %v645
          %v676 = vpack.c.b16 %v648, %v646
          %v677 = vpack.c.b16 %v651, %v649
          %v678 = vpack.c.b16 %v652, %v650
          %v679 = vpack.c.b16 %v655, %v653
          %v680 = vpack.c.b16 %v656, %v654
          %v681 = vpack.c.b16 %v659, %v657
          %v682 = vpack.c.b16 %v660, %v658
          %v683 = vpack.c.b16 %v663, %v661
          %v684 = vpack.c.b16 %v664, %v662
          %v685 = vpack.c.b16 %v667, %v665
          %v686 = vpack.c.b16 %v668, %v666
          %v687 = vpack.c.b16 %v671, %v669
          %v688 = vpack.c.b16 %v672, %v670
          %705 = vmatprep.subr.bf16.mxu0 %v674
          %706 = vmatpush1.bf16.msra.mxu0 %v673
          %707 = vmatprep.subr.bf16.mxu0 %v676
          %708 = vmatpush1.bf16.msra.mxu0 %v675
          %709 = vmatprep.subr.bf16.mxu0 %v678
          %710 = vmatpush1.bf16.msra.mxu0 %v677
          %711 = vmatprep.subr.bf16.mxu0 %v680
          %712 = vmatpush1.bf16.msra.mxu0 %v679
          %713 = vmatprep.subr.bf16.mxu0 %v682
          %714 = vmatpush1.bf16.msra.mxu0 %v681
          %715 = vmatprep.subr.bf16.mxu0 %v684
          %716 = vmatpush1.bf16.msra.mxu0 %v683
          %717 = vmatprep.subr.bf16.mxu0 %v686
          %718 = vmatpush1.bf16.msra.mxu0 %v685
          %719 = vmatprep.subr.bf16.mxu0 %v688
          %720 = vmatpush1.bf16.msra.mxu0 %v687
          %721 = vmatprep.subr.bf16.mxu0 0
          %722 = vmatpush1.bf16.msra.mxu0 0
          %723 = vmatprep.subr.bf16.mxu0 0
          %724 = vmatpush1.bf16.msra.mxu0 0
          %725 = vmatprep.subr.bf16.mxu0 0
          %726 = vmatpush1.bf16.msra.mxu0 0
          %727 = vmatprep.subr.bf16.mxu0 0
          %728 = vmatpush1.bf16.msra.mxu0 0
          %729 = vmatprep.subr.bf16.mxu0 0
          %730 = vmatpush1.bf16.msra.mxu0 0
          %731 = vmatprep.subr.bf16.mxu0 0
          %732 = vmatpush1.bf16.msra.mxu0 0
          %733 = vmatprep.subr.bf16.mxu0 0
          %734 = vmatpush1.bf16.msra.mxu0 0
          %735 = vmatprep.subr.bf16.mxu0 0
          %736 = vmatpush1.bf16.msra.mxu0 0
          %737 = vmatprep.mubr.bf16.mxu0 0
          %738 = vmatmul.mubr.bf16.gmra.mrb[0].mxu0 %v621
          %v739 = vpop.f32.mrb[0].mxu0
          %v740 = vadd.f32 0.0, %v739
          %v741 = vpop.f32.mrb[0].mxu0
          %v742 = vadd.f32 0.0, %v741
          %v743 = vpop.f32.mrb[0].mxu0
          %v744 = vadd.f32 0.0, %v743
          %v745 = vpop.f32.mrb[0].mxu0
          %v746 = vadd.f32 0.0, %v745
          %747 = vmatprep.mubr.bf16.mxu0 0
          %748 = vmatmul.mubr.bf16.gmra.mrb[0].mxu0 %v622
          %v749 = vpop.f32.mrb[0].mxu0
          %v750 = vadd.f32 0.0, %v749
          %v751 = vpop.f32.mrb[0].mxu0
          %v752 = vadd.f32 0.0, %v751
          %v753 = vpop.f32.mrb[0].mxu0
          %v754 = vadd.f32 0.0, %v753
          %v755 = vpop.f32.mrb[0].mxu0
          %v756 = vadd.f32 0.0, %v755
          %757 = vdwg.mxu0
          %v758 = vadd.f32 %v740, %v744
          %v759 = vadd.f32 %v758, %v750
          %v760 = vadd.f32 %v759, %v754
          %v761 = vrot.slane %v760, 4
          %v762 = vadd.f32 %v760, %v761
          %v763 = vrot.slane %v762, 2
          %v764 = vadd.f32 %v762, %v763
          %v765 = vrot.slane %v764, 1
          %v766 = vadd.f32 %v764, %v765
          %v767 = vadd.f32 %v742, %v746
          %v768 = vadd.f32 %v767, %v752
          %v769 = vadd.f32 %v768, %v756
          %v770 = vrot.slane %v769, 4
          %v771 = vadd.f32 %v769, %v770
          %v772 = vrot.slane %v771, 2
          %v773 = vadd.f32 %v771, %v772
          %v774 = vrot.slane %v773, 1
          %v775 = vadd.f32 %v773, %v774
          %v776 = vmul.f32 %v740, %v740
          %v777 = vmul.f32 %v742, %v742
          %v778 = vmul.f32 %v744, %v744
          %v779 = vmul.f32 %v746, %v746
          %v780 = vmul.f32 %v750, %v750
          %v781 = vmul.f32 %v752, %v752
          %v782 = vmul.f32 %v754, %v754
          %v783 = vmul.f32 %v756, %v756
          %v784 = vadd.f32 %v776, %v778
          %v785 = vadd.f32 %v784, %v780
          %v786 = vadd.f32 %v785, %v782
          %v787 = vrot.slane %v786, 4
          %v788 = vadd.f32 %v786, %v787
          %v789 = vrot.slane %v788, 2
          %v790 = vadd.f32 %v788, %v789
          %v791 = vrot.slane %v790, 1
          %v792 = vadd.f32 %v790, %v791
          %v793 = vadd.f32 %v777, %v779
          %v794 = vadd.f32 %v793, %v781
          %v795 = vadd.f32 %v794, %v783
          %v796 = vrot.slane %v795, 4
          %v797 = vadd.f32 %v795, %v796
          %v798 = vrot.slane %v797, 2
          %v799 = vadd.f32 %v797, %v798
          %v800 = vrot.slane %v799, 1
          %v801 = vadd.f32 %v799, %v800
          %p802 = scmp.eq.s32.totalorder %s31, 0
          // Predicated region
          $region85: #{generator_forward.1} parent=83 // pred_check
            %p803 = pneg %p802
          $region86: #{generator_forward.1} parent=83 // pred_check_branch
            %805 = sbr.rel (%p803) target = $region88
          $region87: #{generator_forward.1} parent=83 // pred_region
            %v808 = vcombine.low %v766, %v775
            %v810 = vunpack.c.l.s4 1966171168
            %v811 = vunpack.c.0.s8 %v810
            %v812 = vlaneseq
            %v813 = vshrl.u32 %v812, 7
            %v814 = vsub.s32 %v811, %v813
            %v815 = vrot.slane %v808, %v814
            %v817 = vunpack.c.l.s4 1966171168
            %v818 = vunpack.c.0.s8 %v817
            %v819 = vlaneseq
            %v820 = vshrl.u32 %v819, 7
            %v821 = vsub.s32 %v818, %v820
            %v822 = vrot.slane %v815, %v821
            %v824 = vlaneseq
            %vm825 = vcmp.ge.s32.totalorder %v824, 0
            %vm826 = vcmp.lt.s32.totalorder %v824, 256
            %vm827 = vmand %vm825, %vm826
            %828 = vst.msk [vmem:[#allocation5] sm:$0x3] %vm827, %v822
            %v831 = vcombine.low %v792, %v801
            %v833 = vunpack.c.l.s4 1966171168
            %v834 = vunpack.c.0.s8 %v833
            %v835 = vlaneseq
            %v836 = vshrl.u32 %v835, 7
            %v837 = vsub.s32 %v834, %v836
            %v838 = vrot.slane %v831, %v837
            %v840 = vunpack.c.l.s4 1966171168
            %v841 = vunpack.c.0.s8 %v840
            %v842 = vlaneseq
            %v843 = vshrl.u32 %v842, 7
            %v844 = vsub.s32 %v841, %v843
            %v845 = vrot.slane %v838, %v844
            %847 = vst.msk [vmem:[#allocation6] sm:$0x3] %vm827, %v845
          $region88: #{generator_forward.1} parent=83 // pred_fallthru
            _
          %p848 = scmp.ne.s32.totalorder %s31, 0
          // Predicated region
          $region89: #{generator_forward.1} parent=83 // pred_check
            %p849 = pneg %p848
          $region90: #{generator_forward.1} parent=83 // pred_check_branch
            %851 = sbr.rel (%p849) target = $region92
          $region91: #{generator_forward.1} parent=83 // pred_region
            %v852 = vld [vmem:[#allocation5] sm:$0x3]
            %v855 = vcombine.low %v766, %v775
            %v857 = vunpack.c.l.s4 1966171168
            %v858 = vunpack.c.0.s8 %v857
            %v859 = vlaneseq
            %v860 = vshrl.u32 %v859, 7
            %v861 = vsub.s32 %v858, %v860
            %v862 = vrot.slane %v855, %v861
            %v864 = vunpack.c.l.s4 1966171168
            %v865 = vunpack.c.0.s8 %v864
            %v866 = vlaneseq
            %v867 = vshrl.u32 %v866, 7
            %v868 = vsub.s32 %v865, %v867
            %v869 = vrot.slane %v862, %v868
            %v871 = vadd.f32 %v852, %v869
            %v872 = vlaneseq
            %vm873 = vcmp.ge.s32.totalorder %v872, 0
            %vm874 = vcmp.lt.s32.totalorder %v872, 256
            %vm875 = vmand %vm873, %vm874
            %876 = vst.msk [vmem:[#allocation5] sm:$0x3] %vm875, %v871
            %v877 = vld [vmem:[#allocation6] sm:$0x3]
            %v880 = vcombine.low %v792, %v801
            %v882 = vunpack.c.l.s4 1966171168
            %v883 = vunpack.c.0.s8 %v882
            %v884 = vlaneseq
            %v885 = vshrl.u32 %v884, 7
            %v886 = vsub.s32 %v883, %v885
            %v887 = vrot.slane %v880, %v886
            %v889 = vunpack.c.l.s4 1966171168
            %v890 = vunpack.c.0.s8 %v889
            %v891 = vlaneseq
            %v892 = vshrl.u32 %v891, 7
            %v893 = vsub.s32 %v890, %v892
            %v894 = vrot.slane %v887, %v893
            %v896 = vadd.f32 %v877, %v894
            %897 = vst.msk [vmem:[#allocation6] sm:$0x3] %vm875, %v896
          $region92: #{generator_forward.1} parent=83 // pred_fallthru
            _
          %v898 = vpack.c.bf16 %v744, %v740
          %v899 = vpack.c.bf16 %v746, %v742
          %v900 = vpack.c.bf16 %v754, %v750
          %v901 = vpack.c.bf16 %v756, %v752
          %s902 = sshra.s32 %s588, 4
          %s903 = sand.u32 %s588, 15
          %s904 = smul.u32 %s902, 2
          %s905 = smul.addr %s904, 8
          %s906 = scalar_lea.vmem [#allocation2], %s905
          %907 = vst [vmem:[%s906] sm:$0xff] %v898
          %908 = vst [vmem:[%s906 + $0x8] sm:$0xff] %v899
          %909 = vst [vmem:[%s906 + $0x10] sm:$0xff] %v900
          %910 = vst [vmem:[%s906 + $0x18] sm:$0xff] %v901
          // Predicated region
          $region93: #{generator_forward.1} parent=83 // pred_check
            %p911 = pneg %p802
          $region94: #{generator_forward.1} parent=83 // pred_check_branch
            %913 = sbr.rel (%p911) target = $region96
          $region95: #{generator_forward.1} parent=83 // pred_region
            %v914 = vld [vmem:[%s8] sm:$0x3]
            %v915 = vld [vmem:[%s9] sm:$0x3]
            %v916 = vld [vmem:[#allocation5] sm:$0x3]
            %v917 = vmul.f32 %v916, 0.125
            %v918 = vld [vmem:[#allocation6] sm:$0x3]
            %v919 = vmul.f32 %v918, 0.125
            %v920 = vmul.f32 %v917, %v917
            %v921 = vsub.f32 %v919, %v920
            %v922 = vmax.f32 %v921, 0.0
            %v923 = vadd.f32 %v922, 1e-05
            %v924 = vrsqrt.pop %v923
            %v925 = vmul.f32 %v914, %v924
            %v926 = vmul.f32 %v925, 2.0
            %v927 = vlaneseq
            %vm928 = vcmp.ge.s32.totalorder %v927, 0
            %vm929 = vcmp.lt.s32.totalorder %v927, 256
            %vm930 = vmand %vm928, %vm929
            %931 = vst.msk [vmem:[#allocation7] sm:$0x3] %vm930, %v926
            %v932 = vmul.f32 %v917, %v925
            %v933 = vsub.f32 %v915, %v932
            %v934 = vmul.f32 %v933, 2.0
            %935 = vst.msk [vmem:[#allocation8] sm:$0x3] %vm930, %v934
          $region96: #{generator_forward.1} parent=83 // pred_fallthru
            _
        $region84: #{generator_forward.1} parent=75 // pred_fallthru
          _
        %p936 = scmp.eq.s32.totalorder %s30, 1
        // Predicated region
        $region97: #{generator_forward.1} parent=75 // pred_check
          %p937 = pneg %p936
        $region98: #{generator_forward.1} parent=75 // pred_check_branch
          %939 = sbr.rel (%p937) target = $region100
        $region99: #{generator_forward.1} parent=75 // pred_region
          %s940 = sshra.s32 %s588, 4
          %s941 = sand.u32 %s588, 15
          %s942 = smul.u32 %s940, 2
          %s943 = smul.addr %s942, 8
          %s944 = scalar_lea.vmem [#allocation2], %s943
          %v945 = vld [vmem:[%s944] sm:$0xff]
          %v946 = vld [vmem:[%s944 + $0x8] sm:$0xff]
          %v947 = vld [vmem:[%s944 + $0x10] sm:$0xff]
          %v948 = vld [vmem:[%s944 + $0x18] sm:$0xff]
          %v949 = vunpack.c.l.bf16 %v945
          %v950 = vunpack.c.l.bf16 %v946
          %v951 = vunpack.c.h.bf16 %v945
          %v952 = vunpack.c.h.bf16 %v946
          %v953 = vunpack.c.l.bf16 %v947
          %v954 = vunpack.c.l.bf16 %v948
          %v955 = vunpack.c.h.bf16 %v947
          %v956 = vunpack.c.h.bf16 %v948
          %v957 = vld [vmem:[#allocation7] sm:$0x3]
          %v959 = vlaneseq
          %v960 = vshrl.u32 %v959, 7
          %v961 = vsub.s32 0, %v960
          %v962 = vrot.slane %v957, %v961
          %v963 = vlaneseq
          %v964 = vshrl.u32 %v963, 7
          %v965 = vsub.s32 1, %v964
          %v966 = vrot.slane %v957, %v965
          %v969 = vmul.f32 %v949, %v962
          %v970 = vmul.f32 %v950, %v966
          %v971 = vmul.f32 %v951, %v962
          %v972 = vmul.f32 %v952, %v966
          %v973 = vmul.f32 %v953, %v962
          %v974 = vmul.f32 %v954, %v966
          %v975 = vmul.f32 %v955, %v962
          %v976 = vmul.f32 %v956, %v966
          %v977 = vld [vmem:[#allocation8] sm:$0x3]
          %v979 = vlaneseq
          %v980 = vshrl.u32 %v979, 7
          %v981 = vsub.s32 0, %v980
          %v982 = vrot.slane %v977, %v981
          %v983 = vlaneseq
          %v984 = vshrl.u32 %v983, 7
          %v985 = vsub.s32 1, %v984
          %v986 = vrot.slane %v977, %v985
          %v989 = vadd.f32 %v969, %v982
          %v990 = vadd.f32 %v970, %v986
          %v991 = vadd.f32 %v971, %v982
          %v992 = vadd.f32 %v972, %v986
          %v993 = vadd.f32 %v973, %v982
          %v994 = vadd.f32 %v974, %v986
          %v995 = vadd.f32 %v975, %v982
          %v996 = vadd.f32 %v976, %v986
          %v997 = vmax.f32 %v989, 0.0
          %v998 = vmax.f32 %v990, 0.0
          %v999 = vmax.f32 %v991, 0.0
          %v1000 = vmax.f32 %v992, 0.0
          %v1001 = vmax.f32 %v993, 0.0
          %v1002 = vmax.f32 %v994, 0.0
          %v1003 = vmax.f32 %v995, 0.0
          %v1004 = vmax.f32 %v996, 0.0
          %v1005 = vld [vmem:[%s566] sm:$0xff]
          %v1006 = vld [vmem:[%s566 + $0x8] sm:$0xff]
          %v1007 = vunpack.c.0.s8 %v1005
          %v1008 = vunpack.c.0.s8 %v1006
          %v1009 = vunpack.c.1.s8 %v1005
          %v1010 = vunpack.c.1.s8 %v1006
          %v1011 = vunpack.c.2.s8 %v1005
          %v1012 = vunpack.c.2.s8 %v1006
          %v1013 = vunpack.c.3.s8 %v1005
          %v1014 = vunpack.c.3.s8 %v1006
          %v1015 = vcvt.s32.f32 %v1007
          %v1016 = vcvt.s32.f32 %v1008
          %v1017 = vcvt.s32.f32 %v1009
          %v1018 = vcvt.s32.f32 %v1010
          %v1019 = vcvt.s32.f32 %v1011
          %v1020 = vcvt.s32.f32 %v1012
          %v1021 = vcvt.s32.f32 %v1013
          %v1022 = vcvt.s32.f32 %v1014
          %v1023 = vmul.f32 %v997, %v1015
          %v1024 = vmul.f32 %v998, %v1016
          %v1025 = vmul.f32 %v999, %v1017
          %v1026 = vmul.f32 %v1000, %v1018
          %v1027 = vmul.f32 %v1001, %v1019
          %v1028 = vmul.f32 %v1002, %v1020
          %v1029 = vmul.f32 %v1003, %v1021
          %v1030 = vmul.f32 %v1004, %v1022
          %v1031 = vpack.c.bf16 %v1025, %v1023
          %v1032 = vpack.c.bf16 %v1026, %v1024
          %v1033 = vpack.c.bf16 %v1029, %v1027
          %v1034 = vpack.c.bf16 %v1030, %v1028
          %v1035 = vld [vmem:[#allocation9] sm:$0xf]
          %v1036 = vld [vmem:[#allocation9 + $0x4] sm:$0xf]
          %v1037 = vld [vmem:[#allocation9 + $0x8] sm:$0xf]
          %v1038 = vld [vmem:[#allocation9 + $0xc] sm:$0xf]
          %v1039 = vld [vmem:[#allocation9 + $0x10] sm:$0xf]
          %v1040 = vld [vmem:[#allocation9 + $0x14] sm:$0xf]
          %v1041 = vld [vmem:[#allocation9 + $0x18] sm:$0xf]
          %v1042 = vld [vmem:[#allocation9 + $0x1c] sm:$0xf]
          %v1043 = vld [vmem:[#allocation9 + $0x20] sm:$0xf]
          %v1044 = vld [vmem:[#allocation9 + $0x24] sm:$0xf]
          %v1045 = vld [vmem:[#allocation9 + $0x28] sm:$0xf]
          %v1046 = vld [vmem:[#allocation9 + $0x2c] sm:$0xf]
          %v1047 = vld [vmem:[#allocation9 + $0x30] sm:$0xf]
          %v1048 = vld [vmem:[#allocation9 + $0x34] sm:$0xf]
          %v1049 = vld [vmem:[#allocation9 + $0x38] sm:$0xf]
          %v1050 = vld [vmem:[#allocation9 + $0x3c] sm:$0xf]
          %v1051 = vld [vmem:[#allocation9 + $0x40] sm:$0xf]
          %v1052 = vld [vmem:[#allocation9 + $0x44] sm:$0xf]
          %v1053 = vld [vmem:[#allocation9 + $0x48] sm:$0xf]
          %v1054 = vld [vmem:[#allocation9 + $0x4c] sm:$0xf]
          %v1055 = vld [vmem:[#allocation9 + $0x50] sm:$0xf]
          %v1056 = vld [vmem:[#allocation9 + $0x54] sm:$0xf]
          %v1057 = vld [vmem:[#allocation9 + $0x58] sm:$0xf]
          %v1058 = vld [vmem:[#allocation9 + $0x5c] sm:$0xf]
          %v1059 = vld [vmem:[#allocation9 + $0x60] sm:$0xf]
          %v1060 = vld [vmem:[#allocation9 + $0x64] sm:$0xf]
          %v1061 = vld [vmem:[#allocation9 + $0x68] sm:$0xf]
          %v1062 = vld [vmem:[#allocation9 + $0x6c] sm:$0xf]
          %v1063 = vld [vmem:[#allocation9 + $0x70] sm:$0xf]
          %v1064 = vld [vmem:[#allocation9 + $0x74] sm:$0xf]
          %v1065 = vld [vmem:[#allocation9 + $0x78] sm:$0xf]
          %v1066 = vld [vmem:[#allocation9 + $0x7c] sm:$0xf]
          %v1099 = vunpack.c.l.b16 %v1035
          %v1100 = vunpack.c.l.b16 %v1036
          %v1101 = vunpack.c.l.b16 %v1037
          %v1102 = vunpack.c.l.b16 %v1038
          %v1103 = vunpack.c.l.b16 %v1039
          %v1104 = vunpack.c.l.b16 %v1040
          %v1105 = vunpack.c.l.b16 %v1041
          %v1106 = vunpack.c.l.b16 %v1042
          %v1107 = vunpack.c.l.b16 %v1043
          %v1108 = vunpack.c.l.b16 %v1044
          %v1109 = vunpack.c.l.b16 %v1045
          %v1110 = vunpack.c.l.b16 %v1046
          %v1111 = vunpack.c.l.b16 %v1047
          %v1112 = vunpack.c.l.b16 %v1048
          %v1113 = vunpack.c.l.b16 %v1049
          %v1114 = vunpack.c.l.b16 %v1050
          %v1115 = vunpack.c.l.b16 %v1051
          %v1116 = vunpack.c.l.b16 %v1052
          %v1117 = vunpack.c.l.b16 %v1053
          %v1118 = vunpack.c.l.b16 %v1054
          %v1119 = vunpack.c.l.b16 %v1055
          %v1120 = vunpack.c.l.b16 %v1056
          %v1121 = vunpack.c.l.b16 %v1057
          %v1122 = vunpack.c.l.b16 %v1058
          %v1123 = vunpack.c.l.b16 %v1059
          %v1124 = vunpack.c.l.b16 %v1060
          %v1125 = vunpack.c.l.b16 %v1061
          %v1126 = vunpack.c.l.b16 %v1062
          %v1127 = vunpack.c.l.b16 %v1063
          %v1128 = vunpack.c.l.b16 %v1064
          %v1129 = vunpack.c.l.b16 %v1065
          %v1130 = vunpack.c.l.b16 %v1066
          %v1131 = vpack.c.b16 %v1100, %v1099
          %v1132 = vpack.c.b16 %v1102, %v1101
          %v1133 = vpack.c.b16 %v1104, %v1103
          %v1134 = vpack.c.b16 %v1106, %v1105
          %v1135 = vpack.c.b16 %v1108, %v1107
          %v1136 = vpack.c.b16 %v1110, %v1109
          %v1137 = vpack.c.b16 %v1112, %v1111
          %v1138 = vpack.c.b16 %v1114, %v1113
          %v1139 = vpack.c.b16 %v1116, %v1115
          %v1140 = vpack.c.b16 %v1118, %v1117
          %v1141 = vpack.c.b16 %v1120, %v1119
          %v1142 = vpack.c.b16 %v1122, %v1121
          %v1143 = vpack.c.b16 %v1124, %v1123
          %v1144 = vpack.c.b16 %v1126, %v1125
          %v1145 = vpack.c.b16 %v1128, %v1127
          %v1146 = vpack.c.b16 %v1130, %v1129
          %1163 = vmatprep.subr.bf16.mxu0 0
          %1164 = vmatpush1.bf16.msra.mxu0 %v1131
          %1165 = vmatprep.subr.bf16.mxu0 0
          %1166 = vmatpush1.bf16.msra.mxu0 %v1132
          %1167 = vmatprep.subr.bf16.mxu0 0
          %1168 = vmatpush1.bf16.msra.mxu0 %v1133
          %1169 = vmatprep.subr.bf16.mxu0 0
          %1170 = vmatpush1.bf16.msra.mxu0 %v1134
          %1171 = vmatprep.subr.bf16.mxu0 0
          %1172 = vmatpush1.bf16.msra.mxu0 %v1135
          %1173 = vmatprep.subr.bf16.mxu0 0
          %1174 = vmatpush1.bf16.msra.mxu0 %v1136
          %1175 = vmatprep.subr.bf16.mxu0 0
          %1176 = vmatpush1.bf16.msra.mxu0 %v1137
          %1177 = vmatprep.subr.bf16.mxu0 0
          %1178 = vmatpush1.bf16.msra.mxu0 %v1138
          %1179 = vmatprep.subr.bf16.mxu0 0
          %1180 = vmatpush1.bf16.msra.mxu0 %v1139
          %1181 = vmatprep.subr.bf16.mxu0 0
          %1182 = vmatpush1.bf16.msra.mxu0 %v1140
          %1183 = vmatprep.subr.bf16.mxu0 0
          %1184 = vmatpush1.bf16.msra.mxu0 %v1141
          %1185 = vmatprep.subr.bf16.mxu0 0
          %1186 = vmatpush1.bf16.msra.mxu0 %v1142
          %1187 = vmatprep.subr.bf16.mxu0 0
          %1188 = vmatpush1.bf16.msra.mxu0 %v1143
          %1189 = vmatprep.subr.bf16.mxu0 0
          %1190 = vmatpush1.bf16.msra.mxu0 %v1144
          %1191 = vmatprep.subr.bf16.mxu0 0
          %1192 = vmatpush1.bf16.msra.mxu0 %v1145
          %1193 = vmatprep.subr.bf16.mxu0 0
          %1194 = vmatpush1.bf16.msra.mxu0 %v1146
          %1195 = vmatprep.mubr.bf16.mxu0 %v1032
          %1196 = vmatmul.mubr.bf16.gmra.mrb[0].mxu0 %v1031
          %v1197 = vpop.f32.mrb[0].mxu0
          %v1198 = vadd.f32 0.0, %v1197
          %v1199 = vpop.f32.mrb[0].mxu0
          %v1200 = vpop.f32.mrb[0].mxu0
          %v1201 = vadd.f32 0.0, %v1200
          %v1202 = vpop.f32.mrb[0].mxu0
          %1203 = vmatprep.mubr.bf16.mxu0 %v1034
          %1204 = vmatmul.mubr.bf16.gmra.mrb[0].mxu0 %v1033
          %v1205 = vpop.f32.mrb[0].mxu0
          %v1206 = vadd.f32 0.0, %v1205
          %v1207 = vpop.f32.mrb[0].mxu0
          %v1208 = vpop.f32.mrb[0].mxu0
          %v1209 = vadd.f32 0.0, %v1208
          %v1210 = vpop.f32.mrb[0].mxu0
          %1211 = vdwg.mxu0
          %v1212 = vadd.f32 %v1198, %v1201
          %v1213 = vadd.f32 %v1212, %v1206
          %v1214 = vadd.f32 %v1213, %v1209
          %v1215 = vrot.slane %v1214, 4
          %v1216 = vadd.f32 %v1214, %v1215
          %v1217 = vrot.slane %v1216, 2
          %v1218 = vadd.f32 %v1216, %v1217
          %v1219 = vrot.slane %v1218, 1
          %v1220 = vadd.f32 %v1218, %v1219
          %v1221 = vmul.f32 %v1198, %v1198
          %v1222 = vmul.f32 %v1201, %v1201
          %v1223 = vmul.f32 %v1206, %v1206
          %v1224 = vmul.f32 %v1209, %v1209
          %v1225 = vadd.f32 %v1221, %v1222
          %v1226 = vadd.f32 %v1225, %v1223
          %v1227 = vadd.f32 %v1226, %v1224
          %v1228 = vrot.slane %v1227, 4
          %v1229 = vadd.f32 %v1227, %v1228
          %v1230 = vrot.slane %v1229, 2
          %v1231 = vadd.f32 %v1229, %v1230
          %v1232 = vrot.slane %v1231, 1
          %v1233 = vadd.f32 %v1231, %v1232
          %p1234 = scmp.eq.s32.totalorder %s31, 0
          // Predicated region
          $region101: #{generator_forward.1} parent=99 // pred_check
            %p1235 = pneg %p1234
          $region102: #{generator_forward.1} parent=99 // pred_check_branch
            %1237 = sbr.rel (%p1235) target = $region104
          $region103: #{generator_forward.1} parent=99 // pred_region
            %v1238 = vlaneseq
            %vm1239 = vcmp.ge.s32.totalorder %v1238, 0
            %vm1240 = vcmp.lt.s32.totalorder %v1238, 128
            %vm1241 = vmand %vm1239, %vm1240
            %1242 = vst.msk [vmem:[#allocation5] sm:$0x1] %vm1241, %v1220
            %1243 = vst.msk [vmem:[#allocation6] sm:$0x1] %vm1241, %v1233
          $region104: #{generator_forward.1} parent=99 // pred_fallthru
            _
          %p1244 = scmp.ne.s32.totalorder %s31, 0
          // Predicated region
          $region105: #{generator_forward.1} parent=99 // pred_check
            %p1245 = pneg %p1244
          $region106: #{generator_forward.1} parent=99 // pred_check_branch
            %1247 = sbr.rel (%p1245) target = $region108
          $region107: #{generator_forward.1} parent=99 // pred_region
            %v1248 = vld [vmem:[#allocation5] sm:$0x1]
            %v1249 = vadd.f32 %v1248, %v1220
            %v1250 = vlaneseq
            %vm1251 = vcmp.ge.s32.totalorder %v1250, 0
            %vm1252 = vcmp.lt.s32.totalorder %v1250, 128
            %vm1253 = vmand %vm1251, %vm1252
            %1254 = vst.msk [vmem:[#allocation5] sm:$0x1] %vm1253, %v1249
            %v1255 = vld [vmem:[#allocation6] sm:$0x1]
            %v1256 = vadd.f32 %v1255, %v1233
            %1257 = vst.msk [vmem:[#allocation6] sm:$0x1] %vm1253, %v1256
          $region108: #{generator_forward.1} parent=99 // pred_fallthru
            _
          %v1258 = vpack.c.bf16 %v1201, %v1198
          %v1259 = vpack.c.bf16 %v1209, %v1206
          %s1260 = smul.addr %s940, 8
          %s1261 = scalar_lea.vmem [#allocation3], %s1260
          %1262 = vst [vmem:[%s1261] sm:$0xff] %v1258
          %1263 = vst [vmem:[%s1261 + $0x8] sm:$0xff] %v1259
          // Predicated region
          $region109: #{generator_forward.1} parent=99 // pred_check
            %p1264 = pneg %p1234
          $region110: #{generator_forward.1} parent=99 // pred_check_branch
            %1266 = sbr.rel (%p1264) target = $region112
          $region111: #{generator_forward.1} parent=99 // pred_region
            %v1267 = vld [vmem:[%s10] sm:$0x1]
            %v1268 = vld [vmem:[%s11] sm:$0x1]
            %v1269 = vld [vmem:[#allocation5] sm:$0x1]
            %v1270 = vmul.f32 %v1269, 0.125
            %v1271 = vld [vmem:[#allocation6] sm:$0x1]
            %v1272 = vmul.f32 %v1271, 0.125
            %v1273 = vmul.f32 %v1270, %v1270
            %v1274 = vsub.f32 %v1272, %v1273
            %v1275 = vmax.f32 %v1274, 0.0
            %v1276 = vadd.f32 %v1275, 1e-05
            %v1277 = vrsqrt.pop %v1276
            %v1278 = vmul.f32 %v1267, %v1277
            %v1279 = vmul.f32 %v1278, 2.0
            %v1280 = vlaneseq
            %vm1281 = vcmp.ge.s32.totalorder %v1280, 0
            %vm1282 = vcmp.lt.s32.totalorder %v1280, 128
            %vm1283 = vmand %vm1281, %vm1282
            %1284 = vst.msk [vmem:[#allocation7] sm:$0x1] %vm1283, %v1279
            %v1285 = vmul.f32 %v1270, %v1278
            %v1286 = vsub.f32 %v1268, %v1285
            %v1287 = vmul.f32 %v1286, 2.0
            %1288 = vst.msk [vmem:[#allocation8] sm:$0x1] %vm1283, %v1287
          $region112: #{generator_forward.1} parent=99 // pred_fallthru
            _
        $region100: #{generator_forward.1} parent=75 // pred_fallthru
          _
        %p1289 = scmp.eq.s32.totalorder %s30, 2
        // Predicated region
        $region113: #{generator_forward.1} parent=75 // pred_check
          %p1290 = pneg %p1289
        $region114: #{generator_forward.1} parent=75 // pred_check_branch
          %1292 = sbr.rel (%p1290) target = $region116
        $region115: #{generator_forward.1} parent=75 // pred_region
          %s1293 = sshra.s32 %s588, 4
          %s1294 = sand.u32 %s588, 15
          %s1295 = smul.addr %s1293, 8
          %s1296 = scalar_lea.vmem [#allocation3], %s1295
          %v1297 = vld [vmem:[%s1296] sm:$0xff]
          %v1298 = vld [vmem:[%s1296 + $0x8] sm:$0xff]
          %v1299 = vunpack.c.l.bf16 %v1297
          %v1300 = vunpack.c.h.bf16 %v1297
          %v1301 = vunpack.c.l.bf16 %v1298
          %v1302 = vunpack.c.h.bf16 %v1298
          %v1303 = vld [vmem:[#allocation7] sm:$0x1]
          %v1305 = vlaneseq
          %v1306 = vshrl.u32 %v1305, 7
          %v1307 = vsub.s32 0, %v1306
          %v1308 = vrot.slane %v1303, %v1307
          %v1310 = vmul.f32 %v1299, %v1308
          %v1311 = vmul.f32 %v1300, %v1308
          %v1312 = vmul.f32 %v1301, %v1308
          %v1313 = vmul.f32 %v1302, %v1308
          %v1314 = vld [vmem:[#allocation8] sm:$0x1]
          %v1316 = vlaneseq
          %v1317 = vshrl.u32 %v1316, 7
          %v1318 = vsub.s32 0, %v1317
          %v1319 = vrot.slane %v1314, %v1318
          %v1321 = vadd.f32 %v1310, %v1319
          %v1322 = vadd.f32 %v1311, %v1319
          %v1323 = vadd.f32 %v1312, %v1319
          %v1324 = vadd.f32 %v1313, %v1319
          %v1325 = vmax.f32 %v1321, 0.0
          %v1326 = vmax.f32 %v1322, 0.0
          %v1327 = vmax.f32 %v1323, 0.0
          %v1328 = vmax.f32 %v1324, 0.0
          %v1329 = vld [vmem:[%s574] sm:$0xff]
          %v1330 = vunpack.c.0.s8 %v1329
          %v1331 = vunpack.c.1.s8 %v1329
          %v1332 = vunpack.c.2.s8 %v1329
          %v1333 = vunpack.c.3.s8 %v1329
          %v1334 = vcvt.s32.f32 %v1330
          %v1335 = vcvt.s32.f32 %v1331
          %v1336 = vcvt.s32.f32 %v1332
          %v1337 = vcvt.s32.f32 %v1333
          %v1338 = vmul.f32 %v1325, %v1334
          %v1339 = vmul.f32 %v1326, %v1335
          %v1340 = vmul.f32 %v1327, %v1336
          %v1341 = vmul.f32 %v1328, %v1337
          %v1342 = vpack.c.bf16 %v1339, %v1338
          %v1343 = vpack.c.bf16 %v1341, %v1340
          %v1344 = vld [vmem:[%s5] sm:$0xf]
          %v1345 = vld [vmem:[%s5 + $0x4] sm:$0xf]
          %v1346 = vld [vmem:[%s5 + $0x8] sm:$0xf]
          %v1347 = vld [vmem:[%s5 + $0xc] sm:$0xf]
          %v1348 = vld [vmem:[%s5 + $0x10] sm:$0xf]
          %v1349 = vld [vmem:[%s5 + $0x14] sm:$0xf]
          %v1350 = vld [vmem:[%s5 + $0x18] sm:$0xf]
          %v1351 = vld [vmem:[%s5 + $0x1c] sm:$0xf]
          %v1352 = vld [vmem:[%s5 + $0x20] sm:$0xf]
          %v1353 = vld [vmem:[%s5 + $0x24] sm:$0xf]
          %v1354 = vld [vmem:[%s5 + $0x28] sm:$0xf]
          %v1355 = vld [vmem:[%s5 + $0x2c] sm:$0xf]
          %v1356 = vld [vmem:[%s5 + $0x30] sm:$0xf]
          %v1357 = vld [vmem:[%s5 + $0x34] sm:$0xf]
          %v1358 = vld [vmem:[%s5 + $0x38] sm:$0xf]
          %v1359 = vld [vmem:[%s5 + $0x3c] sm:$0xf]
          %v1376 = vunpack.c.l.b16 %v1344
          %v1377 = vunpack.c.l.b16 %v1345
          %v1378 = vunpack.c.l.b16 %v1346
          %v1379 = vunpack.c.l.b16 %v1347
          %v1380 = vunpack.c.l.b16 %v1348
          %v1381 = vunpack.c.l.b16 %v1349
          %v1382 = vunpack.c.l.b16 %v1350
          %v1383 = vunpack.c.l.b16 %v1351
          %v1384 = vunpack.c.l.b16 %v1352
          %v1385 = vunpack.c.l.b16 %v1353
          %v1386 = vunpack.c.l.b16 %v1354
          %v1387 = vunpack.c.l.b16 %v1355
          %v1388 = vunpack.c.l.b16 %v1356
          %v1389 = vunpack.c.l.b16 %v1357
          %v1390 = vunpack.c.l.b16 %v1358
          %v1391 = vunpack.c.l.b16 %v1359
          %v1392 = vpack.c.b16 %v1377, %v1376
          %v1393 = vpack.c.b16 %v1379, %v1378
          %v1394 = vpack.c.b16 %v1381, %v1380
          %v1395 = vpack.c.b16 %v1383, %v1382
          %v1396 = vpack.c.b16 %v1385, %v1384
          %v1397 = vpack.c.b16 %v1387, %v1386
          %v1398 = vpack.c.b16 %v1389, %v1388
          %v1399 = vpack.c.b16 %v1391, %v1390
          %1408 = vmatprep.subr.bf16.mxu0 0
          %1409 = vmatpush1.bf16.msra.mxu0 %v1392
          %1410 = vmatprep.subr.bf16.mxu0 0
          %1411 = vmatpush1.bf16.msra.mxu0 %v1393
          %1412 = vmatprep.subr.bf16.mxu0 0
          %1413 = vmatpush1.bf16.msra.mxu0 %v1394
          %1414 = vmatprep.subr.bf16.mxu0 0
          %1415 = vmatpush1.bf16.msra.mxu0 %v1395
          %1416 = vmatprep.subr.bf16.mxu0 0
          %1417 = vmatpush1.bf16.msra.mxu0 %v1396
          %1418 = vmatprep.subr.bf16.mxu0 0
          %1419 = vmatpush1.bf16.msra.mxu0 %v1397
          %1420 = vmatprep.subr.bf16.mxu0 0
          %1421 = vmatpush1.bf16.msra.mxu0 %v1398
          %1422 = vmatprep.subr.bf16.mxu0 0
          %1423 = vmatpush1.bf16.msra.mxu0 %v1399
          %1424 = vmatprep.subr.bf16.mxu0 0
          %1425 = vmatpush1.bf16.msra.mxu0 0
          %1426 = vmatprep.subr.bf16.mxu0 0
          %1427 = vmatpush1.bf16.msra.mxu0 0
          %1428 = vmatprep.subr.bf16.mxu0 0
          %1429 = vmatpush1.bf16.msra.mxu0 0
          %1430 = vmatprep.subr.bf16.mxu0 0
          %1431 = vmatpush1.bf16.msra.mxu0 0
          %1432 = vmatprep.subr.bf16.mxu0 0
          %1433 = vmatpush1.bf16.msra.mxu0 0
          %1434 = vmatprep.subr.bf16.mxu0 0
          %1435 = vmatpush1.bf16.msra.mxu0 0
          %1436 = vmatprep.subr.bf16.mxu0 0
          %1437 = vmatpush1.bf16.msra.mxu0 0
          %1438 = vmatprep.subr.bf16.mxu0 0
          %1439 = vmatpush1.bf16.msra.mxu0 0
          %1440 = vmatprep.mubr.bf16.mxu0 0
          %1441 = vmatmul.mubr.bf16.gmra.mrb[0].mxu0 %v1342
          %v1442 = vpop.f32.mrb[0].mxu0
          %v1443 = vadd.f32 0.0, %v1442
          %v1444 = vpop.f32.mrb[0].mxu0
          %v1445 = vpop.f32.mrb[0].mxu0
          %v1446 = vadd.f32 0.0, %v1445
          %v1447 = vpop.f32.mrb[0].mxu0
          %1448 = vmatprep.mubr.bf16.mxu0 0
          %1449 = vmatmul.mubr.bf16.gmra.mrb[0].mxu0 %v1343
          %v1450 = vpop.f32.mrb[0].mxu0
          %v1451 = vadd.f32 0.0, %v1450
          %v1452 = vpop.f32.mrb[0].mxu0
          %v1453 = vpop.f32.mrb[0].mxu0
          %v1454 = vadd.f32 0.0, %v1453
          %v1455 = vpop.f32.mrb[0].mxu0
          %1456 = vdwg.mxu0
          %v1457 = vadd.f32 %v1443, %v1446
          %v1458 = vadd.f32 %v1457, %v1451
          %v1459 = vadd.f32 %v1458, %v1454
          %v1460 = vrot.slane %v1459, 4
          %v1461 = vadd.f32 %v1459, %v1460
          %v1462 = vrot.slane %v1461, 2
          %v1463 = vadd.f32 %v1461, %v1462
          %v1464 = vrot.slane %v1463, 1
          %v1465 = vadd.f32 %v1463, %v1464
          %v1466 = vmul.f32 %v1443, %v1443
          %v1467 = vmul.f32 %v1446, %v1446
          %v1468 = vmul.f32 %v1451, %v1451
          %v1469 = vmul.f32 %v1454, %v1454
          %v1470 = vadd.f32 %v1466, %v1467
          %v1471 = vadd.f32 %v1470, %v1468
          %v1472 = vadd.f32 %v1471, %v1469
          %v1473 = vrot.slane %v1472, 4
          %v1474 = vadd.f32 %v1472, %v1473
          %v1475 = vrot.slane %v1474, 2
          %v1476 = vadd.f32 %v1474, %v1475
          %v1477 = vrot.slane %v1476, 1
          %v1478 = vadd.f32 %v1476, %v1477
          %p1479 = scmp.eq.s32.totalorder %s31, 0
          // Predicated region
          $region117: #{generator_forward.1} parent=115 // pred_check
            %p1480 = pneg %p1479
          $region118: #{generator_forward.1} parent=115 // pred_check_branch
            %1482 = sbr.rel (%p1480) target = $region120
          $region119: #{generator_forward.1} parent=115 // pred_region
            %v1483 = vlaneseq
            %vm1484 = vcmp.ge.s32.totalorder %v1483, 0
            %vm1485 = vcmp.lt.s32.totalorder %v1483, 128
            %vm1486 = vmand %vm1484, %vm1485
            %1487 = vst.msk [vmem:[#allocation5] sm:$0x1] %vm1486, %v1465
            %1488 = vst.msk [vmem:[#allocation6] sm:$0x1] %vm1486, %v1478
          $region120: #{generator_forward.1} parent=115 // pred_fallthru
            _
          %p1489 = scmp.ne.s32.totalorder %s31, 0
          // Predicated region
          $region121: #{generator_forward.1} parent=115 // pred_check
            %p1490 = pneg %p1489
          $region122: #{generator_forward.1} parent=115 // pred_check_branch
            %1492 = sbr.rel (%p1490) target = $region124
          $region123: #{generator_forward.1} parent=115 // pred_region
            %v1493 = vld [vmem:[#allocation5] sm:$0x1]
            %v1494 = vadd.f32 %v1493, %v1465
            %v1495 = vlaneseq
            %vm1496 = vcmp.ge.s32.totalorder %v1495, 0
            %vm1497 = vcmp.lt.s32.totalorder %v1495, 128
            %vm1498 = vmand %vm1496, %vm1497
            %1499 = vst.msk [vmem:[#allocation5] sm:$0x1] %vm1498, %v1494
            %v1500 = vld [vmem:[#allocation6] sm:$0x1]
            %v1501 = vadd.f32 %v1500, %v1478
            %1502 = vst.msk [vmem:[#allocation6] sm:$0x1] %vm1498, %v1501
          $region124: #{generator_forward.1} parent=115 // pred_fallthru
            _
          %v1503 = vpack.c.bf16 %v1446, %v1443
          %v1504 = vpack.c.bf16 %v1454, %v1451
          %s1505 = smul.addr %s1293, 8
          %s1506 = scalar_lea.vmem [#allocation4], %s1505
          %1507 = vst [vmem:[%s1506] sm:$0xff] %v1503
          %1508 = vst [vmem:[%s1506 + $0x8] sm:$0xff] %v1504
          // Predicated region
          $region125: #{generator_forward.1} parent=115 // pred_check
            %p1509 = pneg %p1479
          $region126: #{generator_forward.1} parent=115 // pred_check_branch
            %1511 = sbr.rel (%p1509) target = $region128
          $region127: #{generator_forward.1} parent=115 // pred_region
            %v1512 = vld [vmem:[%s12] sm:$0x1]
            %v1513 = vld [vmem:[%s13] sm:$0x1]
            %v1514 = vld [vmem:[#allocation5] sm:$0x1]
            %v1515 = vmul.f32 %v1514, 0.125
            %v1516 = vld [vmem:[#allocation6] sm:$0x1]
            %v1517 = vmul.f32 %v1516, 0.125
            %v1518 = vmul.f32 %v1515, %v1515
            %v1519 = vsub.f32 %v1517, %v1518
            %v1520 = vmax.f32 %v1519, 0.0
            %v1521 = vadd.f32 %v1520, 1e-05
            %v1522 = vrsqrt.pop %v1521
            %v1523 = vmul.f32 %v1512, %v1522
            %v1524 = vlaneseq
            %vm1525 = vcmp.ge.s32.totalorder %v1524, 0
            %vm1526 = vcmp.lt.s32.totalorder %v1524, 128
            %vm1527 = vmand %vm1525, %vm1526
            %1528 = vst.msk [vmem:[#allocation7] sm:$0x1] %vm1527, %v1523
            %v1529 = vmul.f32 %v1515, %v1523
            %v1530 = vsub.f32 %v1513, %v1529
            %1531 = vst.msk [vmem:[#allocation8] sm:$0x1] %vm1527, %v1530
          $region128: #{generator_forward.1} parent=115 // pred_fallthru
            _
        $region116: #{generator_forward.1} parent=75 // pred_fallthru
          _
        %p1532 = scmp.eq.s32.totalorder %s30, 3
        // Predicated region
        $region129: #{generator_forward.1} parent=75 // pred_check
          %p1533 = pneg %p1532
        $region130: #{generator_forward.1} parent=75 // pred_check_branch
          %1535 = sbr.rel (%p1533) target = $region132
        $region131: #{generator_forward.1} parent=75 // pred_region
          %s1536 = sshra.s32 %s588, 4
          %s1537 = sand.u32 %s588, 15
          %s1538 = smul.addr %s1536, 8
          %s1539 = scalar_lea.vmem [#allocation4], %s1538
          %v1540 = vld [vmem:[%s1539] sm:$0xff]
          %v1541 = vld [vmem:[%s1539 + $0x8] sm:$0xff]
          %v1542 = vunpack.c.l.bf16 %v1540
          %v1543 = vunpack.c.h.bf16 %v1540
          %v1544 = vunpack.c.l.bf16 %v1541
          %v1545 = vunpack.c.h.bf16 %v1541
          %v1546 = vld [vmem:[#allocation7] sm:$0x1]
          %v1548 = vlaneseq
          %v1549 = vshrl.u32 %v1548, 7
          %v1550 = vsub.s32 0, %v1549
          %v1551 = vrot.slane %v1546, %v1550
          %v1553 = vmul.f32 %v1542, %v1551
          %v1554 = vmul.f32 %v1543, %v1551
          %v1555 = vmul.f32 %v1544, %v1551
          %v1556 = vmul.f32 %v1545, %v1551
          %v1557 = vld [vmem:[#allocation8] sm:$0x1]
          %v1559 = vlaneseq
          %v1560 = vshrl.u32 %v1559, 7
          %v1561 = vsub.s32 0, %v1560
          %v1562 = vrot.slane %v1557, %v1561
          %v1564 = vadd.f32 %v1553, %v1562
          %v1565 = vadd.f32 %v1554, %v1562
          %v1566 = vadd.f32 %v1555, %v1562
          %v1567 = vadd.f32 %v1556, %v1562
          %v1568 = vmax.f32 %v1564, 0.0
          %v1569 = vmax.f32 %v1565, 0.0
          %v1570 = vmax.f32 %v1566, 0.0
          %v1571 = vmax.f32 %v1567, 0.0
          %v1572 = vpack.c.bf16 %v1569, %v1568
          %v1573 = vpack.c.bf16 %v1571, %v1570
          %v1574 = vld [vmem:[%s6] sm:$0xf]
          %v1575 = vld [vmem:[%s6 + $0x4] sm:$0xf]
          %v1576 = vld [vmem:[%s6 + $0x8] sm:$0xf]
          %v1577 = vld [vmem:[%s6 + $0xc] sm:$0xf]
          %v1578 = vld [vmem:[%s6 + $0x10] sm:$0xf]
          %v1579 = vld [vmem:[%s6 + $0x14] sm:$0xf]
          %v1580 = vld [vmem:[%s6 + $0x18] sm:$0xf]
          %v1581 = vld [vmem:[%s6 + $0x1c] sm:$0xf]
          %v1582 = vld [vmem:[%s6 + $0x20] sm:$0xf]
          %v1583 = vld [vmem:[%s6 + $0x24] sm:$0xf]
          %v1584 = vld [vmem:[%s6 + $0x28] sm:$0xf]
          %v1585 = vld [vmem:[%s6 + $0x2c] sm:$0xf]
          %v1586 = vld [vmem:[%s6 + $0x30] sm:$0xf]
          %v1587 = vld [vmem:[%s6 + $0x34] sm:$0xf]
          %v1588 = vld [vmem:[%s6 + $0x38] sm:$0xf]
          %v1589 = vld [vmem:[%s6 + $0x3c] sm:$0xf]
          %v1590 = vld [vmem:[%s7] sm:$0x1]
          %v1592 = vlaneseq
          %v1593 = vshrl.u32 %v1592, 7
          %v1594 = vsub.s32 0, %v1593
          %v1595 = vrot.slane %v1590, %v1594
          %v1613 = vunpack.c.l.b16 %v1574
          %v1614 = vunpack.c.l.b16 %v1575
          %v1615 = vunpack.c.l.b16 %v1576
          %v1616 = vunpack.c.l.b16 %v1577
          %v1617 = vunpack.c.l.b16 %v1578
          %v1618 = vunpack.c.l.b16 %v1579
          %v1619 = vunpack.c.l.b16 %v1580
          %v1620 = vunpack.c.l.b16 %v1581
          %v1621 = vunpack.c.l.b16 %v1582
          %v1622 = vunpack.c.l.b16 %v1583
          %v1623 = vunpack.c.l.b16 %v1584
          %v1624 = vunpack.c.l.b16 %v1585
          %v1625 = vunpack.c.l.b16 %v1586
          %v1626 = vunpack.c.l.b16 %v1587
          %v1627 = vunpack.c.l.b16 %v1588
          %v1628 = vunpack.c.l.b16 %v1589
          %v1629 = vpack.c.b16 %v1614, %v1613
          %v1630 = vpack.c.b16 %v1616, %v1615
          %v1631 = vpack.c.b16 %v1618, %v1617
          %v1632 = vpack.c.b16 %v1620, %v1619
          %v1633 = vpack.c.b16 %v1622, %v1621
          %v1634 = vpack.c.b16 %v1624, %v1623
          %v1635 = vpack.c.b16 %v1626, %v1625
          %v1636 = vpack.c.b16 %v1628, %v1627
          %1645 = vmatprep.subr.bf16.mxu0 0
          %1646 = vmatpush1.bf16.msra.mxu0 %v1629
          %1647 = vmatprep.subr.bf16.mxu0 0
          %1648 = vmatpush1.bf16.msra.mxu0 %v1630
          %1649 = vmatprep.subr.bf16.mxu0 0
          %1650 = vmatpush1.bf16.msra.mxu0 %v1631
          %1651 = vmatprep.subr.bf16.mxu0 0
          %1652 = vmatpush1.bf16.msra.mxu0 %v1632
          %1653 = vmatprep.subr.bf16.mxu0 0
          %1654 = vmatpush1.bf16.msra.mxu0 %v1633
          %1655 = vmatprep.subr.bf16.mxu0 0
          %1656 = vmatpush1.bf16.msra.mxu0 %v1634
          %1657 = vmatprep.subr.bf16.mxu0 0
          %1658 = vmatpush1.bf16.msra.mxu0 %v1635
          %1659 = vmatprep.subr.bf16.mxu0 0
          %1660 = vmatpush1.bf16.msra.mxu0 %v1636
          %1661 = vmatprep.subr.bf16.mxu0 0
          %1662 = vmatpush1.bf16.msra.mxu0 0
          %1663 = vmatprep.subr.bf16.mxu0 0
          %1664 = vmatpush1.bf16.msra.mxu0 0
          %1665 = vmatprep.subr.bf16.mxu0 0
          %1666 = vmatpush1.bf16.msra.mxu0 0
          %1667 = vmatprep.subr.bf16.mxu0 0
          %1668 = vmatpush1.bf16.msra.mxu0 0
          %1669 = vmatprep.subr.bf16.mxu0 0
          %1670 = vmatpush1.bf16.msra.mxu0 0
          %1671 = vmatprep.subr.bf16.mxu0 0
          %1672 = vmatpush1.bf16.msra.mxu0 0
          %1673 = vmatprep.subr.bf16.mxu0 0
          %1674 = vmatpush1.bf16.msra.mxu0 0
          %1675 = vmatprep.subr.bf16.mxu0 0
          %1676 = vmatpush1.bf16.msra.mxu0 0
          %1677 = vmatprep.mubr.bf16.mxu0 0
          %1678 = vmatmul.mubr.bf16.gmra.mrb[0].mxu0 %v1572
          %v1679 = vpop.f32.mrb[0].mxu0
          %v1680 = vadd.f32 %v1595, %v1679
          %v1681 = vpop.f32.mrb[0].mxu0
          %v1682 = vpop.f32.mrb[0].mxu0
          %v1683 = vadd.f32 %v1595, %v1682
          %v1684 = vpop.f32.mrb[0].mxu0
          %1685 = vmatprep.mubr.bf16.mxu0 0
          %1686 = vmatmul.mubr.bf16.gmra.mrb[0].mxu0 %v1573
          %v1687 = vpop.f32.mrb[0].mxu0
          %v1688 = vadd.f32 %v1595, %v1687
          %v1689 = vpop.f32.mrb[0].mxu0
          %v1690 = vpop.f32.mrb[0].mxu0
          %v1691 = vadd.f32 %v1595, %v1690
          %v1692 = vpop.f32.mrb[0].mxu0
          %1693 = vdwg.mxu0
          %v1694 = vtanh.pop %v1680
          %v1695 = vtanh.pop %v1683
          %v1696 = vtanh.pop %v1688
          %v1697 = vtanh.pop %v1691
          %v1698 = vpack.c.bf16 %v1695, %v1694
          %v1699 = vpack.c.bf16 %v1697, %v1696
          %v1702 = vunpack.c.l.b16 %v1698
          %v1703 = vunpack.c.h.b16 %v1698
          %v1704 = vunpack.c.l.b16 %v1699
          %v1705 = vunpack.c.h.b16 %v1699
          %v1706 = vpack.c.b16 %v1702, %v1702
          %v1707 = vpack.c.b16 %v1703, %v1703
          %v1708 = vpack.c.b16 %v1704, %v1704
          %v1709 = vpack.c.b16 %v1705, %v1705
          %1714 = vst [vmem:[%s583] sm:$0xf] %v1706
          %1715 = vst [vmem:[%s583 + $0x4] sm:$0xf] %v1707
          %1716 = vst [vmem:[%s583 + $0x8] sm:$0xf] %v1708
          %1717 = vst [vmem:[%s583 + $0xc] sm:$0xf] %v1709
        $region132: #{generator_forward.1} parent=75 // pred_fallthru
          _
        %p1718 = scmp.eq.s32.totalorder %s30, 3
        %s1719 = scalar_select %p1718, %s31, 0
        %s1720 = smul.u32 4, %s1719
        %p1721 = scmp.lt.s32.totalorder %s1720, 3
        %s1722 = scalar_select %p1721, %s1720, 3
        %s1723 = smul.addr %s1722, 4
        %s1724 = scalar_lea.vmem %s14, %s1723
        // Predicated region
        $region133: #{generator_forward.1} parent=75 // pred_check
          %p1725 = pneg %p381
        $region134: #{generator_forward.1} parent=75 // pred_check_branch
          %1727 = sbr.rel (%p1725) target = $region136
        $region135: #{generator_forward.1} parent=75 // pred_region
          %p1728 = scmp.eq.s32.totalorder %s30, 3
          %s1729 = scalar_select %p1728, %s31, 0
          %s1730 = smul.u32 4, %s1729
        $region136: #{generator_forward.1} parent=75 // pred_fallthru
          _
      $region76: #{generator_forward.1} parent=5 // pred_fallthru
        _
      %p1731 = scmp.le.s32.totalorder 2, %s21
      // Predicated region
      $region137: #{generator_forward.1} parent=5 // pred_check
        %p1732 = pneg %p1731
      $region138: #{generator_forward.1} parent=5 // pred_check_branch
        %1734 = sbr.rel (%p1732) target = $region140
      $region139: #{generator_forward.1} parent=5 // pred_region
        %s1735 = ssub.s32 %s21, 2
        // Predicated region
        $region141: #{generator_forward.1} parent=139 // pred_check
          %p1736 = pneg %p387
        $region142: #{generator_forward.1} parent=139 // pred_check_branch
          %1738 = sbr.rel (%p1736) target = $region144
        $region143: #{generator_forward.1} parent=139 // pred_region
          %p1739 = scmp.eq.s32.totalorder %s32, 3
          %s1740 = scalar_select %p1739, %s33, 0
          %s1741 = smul.u32 4, %s1740
          %p1742 = scmp.lt.s32.totalorder %s1741, 3
          %s1743 = scalar_select %p1742, %s1741, 3
          %s1744 = smul.addr %s1743, 4
          %s1745 = scalar_lea.vmem %s14, %s1744
        $region144: #{generator_forward.1} parent=139 // pred_fallthru
          _
      $region140: #{generator_forward.1} parent=5 // pred_fallthru
        _
    $region6: #{generator_forward.1} parent=1 // loop_footer
      %s25 = sadd.s32 1, %s21
    $region7: #{generator_forward.1} parent=1 // loop_footer_branch
      %20 = sbr.rel target = $region3
    $region8: #{generator_forward.1} parent=1 // loop_exit
      _
    %1746 = vsyncpa [#allocation10], 1
    %s1747 = scalar_lea.sflag [#allocation10], 1
    %1748 = vsyncpa %s1747, 1

</llo_original>
